<compile_context>
chip_gen: v7x
topology: tpu7x:2x2x1
jax: 0.10.0
libtpu: 0.0.40
codegen_flags: <defaults>
</compile_context>

<pallas_src>
import functools
import math

import jax
import jax.numpy as jnp
import numpy as np
from jax.experimental import pallas as pl
from jax.experimental.pallas import tpu as pltpu


def _round_up(x, m):
    return ((x + m - 1) // m) * m


def _tpu_chip_info():
    """Best-effort (generation, tensorcores_per_chip); falls back to (6, 1)."""
    gen, cores = 6, 1
    try:
        kind = jax.devices()[0].device_kind.lower()
        for g in (7, 6, 5, 4, 3, 2):
            if (f"v{g}" in kind) or (f"{g}x" in kind):
                gen = g
                break
        if gen >= 7:
            cores = 2  # v7x: 2 TensorCores per chip share the 1-D 'parallel' grid
    except Exception:
        pass
    return gen, cores


def _full_self_attention_kernel(
    feat_ref, cond_ref,
    wf_qvk_ref, wc_qvk_ref, seg_ref,
    wo1_ref, bo1_ref, wo2_ref, bo2_ref,
    out_ref,
    *, hidden_dim, fold,
):
    H = hidden_dim
    FH = fold * H  # folded hidden width (fold lane-groups of H)

    feat = feat_ref[...]                 # (tq, fold*feat_dim)
    cond = cond_ref[...]                 # (tq, fold*cond_dim)
    w_dtype = wf_qvk_ref.dtype

    # Fused (and, for fold>1, row-folded block-diagonal) Q|V|K projections:
    # two MXU matmuls; rtemp already folded into the K columns.
    f_qvk = jnp.dot(feat, wf_qvk_ref[...], preferred_element_type=jnp.float32)  # (tq, 3*FH)
    c_qvk = jnp.dot(cond, wc_qvk_ref[...], preferred_element_type=jnp.float32)  # (tq, 3*FH)

    feat_Q, feat_V, feat_K = f_qvk[:, :FH], f_qvk[:, FH:2 * FH], f_qvk[:, 2 * FH:]
    cond_Q, cond_V, cond_K = c_qvk[:, :FH], c_qvk[:, FH:2 * FH], c_qvk[:, 2 * FH:]

    K_diff = feat_K - cond_K

    if fold == 1:
        # Unfolded path (f32 / v5e): plain lane reduce, as in the reference.
        feat_att = jax.nn.sigmoid(jnp.sum(feat_Q * K_diff, axis=-1, keepdims=True))
        cond_att = jax.nn.sigmoid(jnp.sum(cond_Q * K_diff, axis=-1, keepdims=True))
    else:
        # Segmented (per logical row) reduce + broadcast over each H-lane group,
        # done on the MXU with a resident 0/1 block mask; sigmoid stays lane-dense.
        seg = seg_ref[...]
        feat_att = jax.nn.sigmoid(
            jnp.dot((feat_Q * K_diff).astype(w_dtype), seg,
                    preferred_element_type=jnp.float32))
        cond_att = jax.nn.sigmoid(
            jnp.dot((cond_Q * K_diff).astype(w_dtype), seg,
                    preferred_element_type=jnp.float32))

    V_diff = feat_V - cond_V
    hid_feat = V_diff * feat_att + cond_V
    hid_cond = V_diff * cond_att + cond_V

    # Output MLP: Linear -> ReLU -> Linear (biases, no out_relu).  The lane concat
    # of [hid_feat, hid_cond] is avoided by splitting wo1's rows and accumulating
    # two matmuls in f32.
    wo1 = wo1_ref[...]
    h1 = (jnp.dot(hid_feat.astype(w_dtype), wo1[:FH, :],
                  preferred_element_type=jnp.float32)
          + jnp.dot(hid_cond.astype(w_dtype), wo1[FH:, :],
                    preferred_element_type=jnp.float32)
          + bo1_ref[...].astype(jnp.float32))
    h1 = jnp.maximum(h1, 0.0)

    out = (jnp.dot(h1.astype(w_dtype), wo2_ref[...],
                   preferred_element_type=jnp.float32)
           + bo2_ref[...].astype(jnp.float32))

    out_ref[...] = out.astype(out_ref.dtype)


def full_self_attention(feat, cond, params, *, hidden_dim, tile_m=4096,
                        stream_bf16=None, fold=None, out_dtype=None):
    """feat: (N, feat_dim), cond: (N, cond_dim) -> (N, feat_dim)."""
    N, feat_dim = feat.shape
    Nc, cond_dim = cond.shape
    assert Nc == N
    comp_hid = params["wo1"].shape[1]
    H = hidden_dim
    rtemp = 1.0 / math.sqrt(hidden_dim)

    gen, cores = _tpu_chip_info()
    if stream_bf16 is None:
        stream_bf16 = gen >= 6          # v5e VPU/EUP have no bf16 -> stay f32 there
    if fold is None:
        fold = (128 // feat_dim) if (stream_bf16 and 0 < feat_dim < 128
                                     and 128 % feat_dim == 0) else 1
    stream_dtype = jnp.bfloat16 if stream_bf16 else jnp.float32
    if out_dtype is None:
        out_dtype = jnp.bfloat16 if stream_bf16 else jnp.float32
    FH = fold * H

    # ---- trace-time weight packing (tiny arrays) ----------------------------
    eye = jnp.eye(fold, dtype=jnp.float32)

    def bd(w):  # fold-way block diagonal
        return w if fold == 1 else jnp.kron(eye, w)

    wf_qvk = jnp.concatenate([bd(params["wfq"]), bd(params["wfv"]),
                              bd(params["wfk"] * rtemp)], axis=1)
    wc_qvk = jnp.concatenate([bd(params["wcq"]), bd(params["wcv"]),
                              bd(params["wck"] * rtemp)], axis=1)
    wo1 = jnp.concatenate([bd(params["wo1"][:H, :]), bd(params["wo1"][H:, :])], axis=0)
    wo2 = bd(params["wo2"])
    bo1 = jnp.tile(params["bo1"], (1, fold))
    bo2 = jnp.tile(params["bo2"], (1, fold))

    gid = np.arange(FH) // H
    seg = jnp.asarray((gid[:, None] == gid[None, :]).astype(np.float32))

    wf_qvk = wf_qvk.astype(stream_dtype)
    wc_qvk = wc_qvk.astype(stream_dtype)
    wo1 = wo1.astype(stream_dtype)
    wo2 = wo2.astype(stream_dtype)
    seg = seg.astype(stream_dtype)
    feat = feat.astype(stream_dtype)
    cond = cond.astype(stream_dtype)

    # ---- row tiling / padding / fold reshape (free, contiguous, in XLA) -----
    sub_align = 16 if (stream_bf16 or out_dtype == jnp.bfloat16) else 8
    align = sub_align * fold
    tile_m = max(align, min(tile_m, _round_up(N, align)))
    if cores > 1:
        # Keep >= 2 grid steps per TensorCore so 'parallel' sharding has work.
        tile_m = min(tile_m, max(align, _round_up(pl.cdiv(N, 2 * cores), align)))
    tile_m = _round_up(tile_m, align)
    n_pad = tile_m * pl.cdiv(N, tile_m)
    if n_pad != N:
        feat = jnp.pad(feat, ((0, n_pad - N), (0, 0)))
        cond = jnp.pad(cond, ((0, n_pad - N), (0, 0)))
    feat_f = feat.reshape(n_pad // fold, fold * feat_dim)
    cond_f = cond.reshape(n_pad // fold, fold * cond_dim)
    tile_q = tile_m // fold

    kernel = functools.partial(_full_self_attention_kernel,
                               hidden_dim=hidden_dim, fold=fold)
    vmem_limit = (40 if gen >= 7 else 64) * 1024 * 1024

    def make_call(single_buffer_residents):
        def resident(shape):
            kw = {}
            if single_buffer_residents:
                kw["pipeline_mode"] = pl.Buffered(1)   # constant index: no double buffer
            return pl.BlockSpec(shape, lambda i: (0, 0), **kw)

        grid_spec = pltpu.PrefetchScalarGridSpec(
            num_scalar_prefetch=0,
            grid=(n_pad // tile_m,),
            in_specs=[
                pl.BlockSpec((tile_q, fold * feat_dim), lambda i: (i, 0)),  # streamed
                pl.BlockSpec((tile_q, fold * cond_dim), lambda i: (i, 0)),  # streamed
                resident(wf_qvk.shape),
                resident(wc_qvk.shape),
                resident(seg.shape),
                resident(wo1.shape),
                resident(bo1.shape),
                resident(wo2.shape),
                resident(bo2.shape),
            ],
            out_specs=pl.BlockSpec((tile_q, fold * feat_dim), lambda i: (i, 0)),
        )
        return pl.pallas_call(
            kernel,
            out_shape=jax.ShapeDtypeStruct((n_pad // fold, fold * feat_dim), out_dtype),
            grid_spec=grid_spec,
            compiler_params=pltpu.CompilerParams(
                dimension_semantics=("parallel",),
                vmem_limit_bytes=vmem_limit),
        )

    args = (feat_f, cond_f, wf_qvk, wc_qvk, seg, wo1, bo1, wo2, bo2)
    try:
        out_f = make_call(True)(*args)
    except Exception:
        # This build rejected pl.Buffered(1); fall back to default double buffering.
        out_f = make_call(False)(*args)

    out = out_f.reshape(n_pad, feat_dim)     # free un-fold (row-major, contiguous)
    return out[:N] if n_pad != N else out


def reference_forward(feat, cond, params, *, hidden_dim):
    """Pure-JAX reference mirroring the PyTorch forward (unpacked weights, f32)."""
    rtemp = 1.0 / math.sqrt(hidden_dim)
    feat_Q = feat @ params["wfq"]
    feat_V = feat @ params["wfv"]
    feat_K = feat @ params["wfk"]
    cond_Q = cond @ params["wcq"]
    cond_V = cond @ params["wcv"]
    cond_K = cond @ params["wck"]
    K_diff = (feat_K - cond_K) * rtemp
    feat_att = jax.nn.sigmoid(jnp.sum(feat_Q * K_diff, -1))[..., None]
    cond_att = jax.nn.sigmoid(jnp.sum(cond_Q * K_diff, -1))[..., None]
    V_diff = feat_V - cond_V
    hid_feat = V_diff * feat_att + cond_V
    hid_cond = V_diff * cond_att + cond_V
    hidden = jnp.concatenate([hid_feat, hid_cond], -1)
    h1 = jnp.maximum(hidden @ params["wo1"] + params["bo1"], 0.0)
    return h1 @ params["wo2"] + params["bo2"]


def init_params(key, feat_dim, cond_dim, hidden_dim, comp_hid):
    ks = jax.random.split(key, 12)

    def lin(k, fan_in, fan_out):
        bound = 1.0 / math.sqrt(fan_in)
        return jax.random.uniform(k, (fan_in, fan_out), jnp.float32, -bound, bound)

    return {
        "wfq": lin(ks[0], feat_dim, hidden_dim),
        "wfv": lin(ks[1], feat_dim, hidden_dim),
        "wfk": lin(ks[2], feat_dim, hidden_dim),
        "wcq": lin(ks[3], cond_dim, hidden_dim),
        "wcv": lin(ks[4], cond_dim, hidden_dim),
        "wck": lin(ks[5], cond_dim, hidden_dim),
        "wo1": lin(ks[6], 2 * hidden_dim, comp_hid),
        "bo1": lin(ks[7], 2 * hidden_dim, comp_hid)[:1, :],   # (1, comp_hid)
        "wo2": lin(ks[8], comp_hid, feat_dim),
        "bo2": lin(ks[9], comp_hid, feat_dim)[:1, :],          # (1, feat_dim)
    }


if __name__ == "__main__":
    N, FEAT_DIM, COND_DIM, HIDDEN_DIM, COMP_HID = 64, 32, 16, 32, 32

    key = jax.random.PRNGKey(0)
    k_feat, k_cond, k_param = jax.random.split(key, 3)
    feat = jax.random.normal(k_feat, (N, FEAT_DIM), jnp.float32)
    cond = jax.random.normal(k_cond, (N, COND_DIM), jnp.float32)
    params = init_params(k_param, FEAT_DIM, COND_DIM, HIDDEN_DIM, COMP_HID)

    # Generation-aware streaming dtype: bf16 on v6e/v7x (loose tolerance),
    # f32 on v5e/older (tight tolerance).
    gen, _ = _tpu_chip_info()
    use_bf16 = gen >= 6

    out = full_self_attention(feat, cond, params, hidden_dim=HIDDEN_DIM,
                              tile_m=4096, stream_bf16=use_bf16)
    out = jax.block_until_ready(out)

    ref = jax.block_until_ready(
        reference_forward(feat, cond, params, hidden_dim=HIDDEN_DIM))

    out_f32 = np.asarray(jax.device_get(out.astype(jnp.float32)))
    ref_f32 = np.asarray(jax.device_get(ref))
    if use_bf16:
        np.testing.assert_allclose(out_f32, ref_f32, rtol=2e-2, atol=5e-2)
    else:
        np.testing.assert_allclose(out_f32, ref_f32, rtol=1e-5, atol=1e-5)
    print("KERNEL_OK")
</pallas_src>

<mosaic_0001>
module attributes {stable_mosaic.version = 11 : i64} {
  func.func @_full_self_attention_kernel(%arg0: i32, %arg1: memref<16x128xbf16, #tpu.memory_space<vmem>>, %arg2: memref<16x64xbf16, #tpu.memory_space<vmem>>, %arg3: memref<128x384xbf16, #tpu.memory_space<vmem>>, %arg4: memref<64x384xbf16, #tpu.memory_space<vmem>>, %arg5: memref<128x128xbf16, #tpu.memory_space<vmem>>, %arg6: memref<256x128xbf16, #tpu.memory_space<vmem>>, %arg7: memref<1x128xf32, #tpu.memory_space<vmem>>, %arg8: memref<128x128xbf16, #tpu.memory_space<vmem>>, %arg9: memref<1x128xf32, #tpu.memory_space<vmem>>, %arg10: memref<16x128xbf16, #tpu.memory_space<vmem>>) attributes {dimension_semantics = [#tpu.dimension_semantics<parallel>], iteration_bounds = array<i64: 1>, scalar_prefetch = 0 : i64, scratch_operands = 0 : i64, tpu.core_type = #tpu.core_type<tc>, window_params = [{transform_indices = @transform_0, window_bounds = array<i64: 16, 128>}, {transform_indices = @transform_1, window_bounds = array<i64: 16, 64>}, {pipeline_mode = #tpu.pipeline_mode<synchronous>, transform_indices = @transform_2, window_bounds = array<i64: 128, 384>}, {pipeline_mode = #tpu.pipeline_mode<synchronous>, transform_indices = @transform_3, window_bounds = array<i64: 64, 384>}, {pipeline_mode = #tpu.pipeline_mode<synchronous>, transform_indices = @transform_4, window_bounds = array<i64: 128, 128>}, {pipeline_mode = #tpu.pipeline_mode<synchronous>, transform_indices = @transform_5, window_bounds = array<i64: 256, 128>}, {pipeline_mode = #tpu.pipeline_mode<synchronous>, transform_indices = @transform_6, window_bounds = array<i64: 1, 128>}, {pipeline_mode = #tpu.pipeline_mode<synchronous>, transform_indices = @transform_7, window_bounds = array<i64: 128, 128>}, {pipeline_mode = #tpu.pipeline_mode<synchronous>, transform_indices = @transform_8, window_bounds = array<i64: 1, 128>}, {transform_indices = @transform_9, window_bounds = array<i64: 16, 128>}]} {
    %c0 = arith.constant 0 : index
    %c0_0 = arith.constant 0 : index
    %0 = vector.load %arg1[%c0, %c0_0] : memref<16x128xbf16, #tpu.memory_space<vmem>>, vector<16x128xbf16>
    %c0_1 = arith.constant 0 : index
    %c0_2 = arith.constant 0 : index
    %1 = vector.load %arg2[%c0_1, %c0_2] : memref<16x64xbf16, #tpu.memory_space<vmem>>, vector<16x64xbf16>
    %c0_3 = arith.constant 0 : index
    %c0_4 = arith.constant 0 : index
    %2 = vector.load %arg3[%c0_3, %c0_4] : memref<128x384xbf16, #tpu.memory_space<vmem>>, vector<128x384xbf16>
    %cst = arith.constant dense<0.000000e+00> : vector<16x384xf32>
    %3 = tpu.matmul %0, %2, %cst {dimension_numbers = #tpu.dot_dimension_numbers<[1], [0], [0], [1], [0, 0, 1, 1], [], []>} : vector<16x128xbf16>, vector<128x384xbf16>, vector<16x384xf32> -> vector<16x384xf32>
    %c0_5 = arith.constant 0 : index
    %c0_6 = arith.constant 0 : index
    %4 = vector.load %arg4[%c0_5, %c0_6] : memref<64x384xbf16, #tpu.memory_space<vmem>>, vector<64x384xbf16>
    %cst_7 = arith.constant dense<0.000000e+00> : vector<16x384xf32>
    %5 = tpu.matmul %1, %4, %cst_7 {dimension_numbers = #tpu.dot_dimension_numbers<[1], [0], [0], [1], [0, 0, 1, 1], [], []>} : vector<16x64xbf16>, vector<64x384xbf16>, vector<16x384xf32> -> vector<16x384xf32>
    %6 = vector.extract_strided_slice %3 {offsets = [0, 0], sizes = [16, 128], strides = [1, 1]} : vector<16x384xf32> to vector<16x128xf32>
    %7 = vector.extract_strided_slice %3 {offsets = [0, 128], sizes = [16, 128], strides = [1, 1]} : vector<16x384xf32> to vector<16x128xf32>
    %8 = vector.extract_strided_slice %3 {offsets = [0, 256], sizes = [16, 128], strides = [1, 1]} : vector<16x384xf32> to vector<16x128xf32>
    %9 = vector.extract_strided_slice %5 {offsets = [0, 0], sizes = [16, 128], strides = [1, 1]} : vector<16x384xf32> to vector<16x128xf32>
    %10 = vector.extract_strided_slice %5 {offsets = [0, 128], sizes = [16, 128], strides = [1, 1]} : vector<16x384xf32> to vector<16x128xf32>
    %11 = vector.extract_strided_slice %5 {offsets = [0, 256], sizes = [16, 128], strides = [1, 1]} : vector<16x384xf32> to vector<16x128xf32>
    %12 = arith.subf %8, %11 : vector<16x128xf32>
    %c0_8 = arith.constant 0 : index
    %c0_9 = arith.constant 0 : index
    %13 = vector.load %arg5[%c0_8, %c0_9] : memref<128x128xbf16, #tpu.memory_space<vmem>>, vector<128x128xbf16>
    %14 = arith.mulf %6, %12 : vector<16x128xf32>
    %15 = arith.truncf %14 : vector<16x128xf32> to vector<16x128xbf16>
    %cst_10 = arith.constant dense<0.000000e+00> : vector<16x128xf32>
    %16 = tpu.matmul %15, %13, %cst_10 {dimension_numbers = #tpu.dot_dimension_numbers<[1], [0], [0], [1], [0, 0, 1, 1], [], []>} : vector<16x128xbf16>, vector<128x128xbf16>, vector<16x128xf32> -> vector<16x128xf32>
    %17 = arith.negf %16 : vector<16x128xf32>
    %18 = math.exp %17 : vector<16x128xf32>
    %cst_11 = arith.constant 1.000000e+00 : f32
    %19 = vector.broadcast %cst_11 : f32 to vector<16x128xf32>
    %20 = arith.addf %19, %18 : vector<16x128xf32>
    %21 = arith.divf %19, %20 : vector<16x128xf32>
    %22 = arith.mulf %9, %12 : vector<16x128xf32>
    %23 = arith.truncf %22 : vector<16x128xf32> to vector<16x128xbf16>
    %cst_12 = arith.constant dense<0.000000e+00> : vector<16x128xf32>
    %24 = tpu.matmul %23, %13, %cst_12 {dimension_numbers = #tpu.dot_dimension_numbers<[1], [0], [0], [1], [0, 0, 1, 1], [], []>} : vector<16x128xbf16>, vector<128x128xbf16>, vector<16x128xf32> -> vector<16x128xf32>
    %25 = arith.negf %24 : vector<16x128xf32>
    %26 = math.exp %25 : vector<16x128xf32>
    %cst_13 = arith.constant 1.000000e+00 : f32
    %27 = vector.broadcast %cst_13 : f32 to vector<16x128xf32>
    %28 = arith.addf %27, %26 : vector<16x128xf32>
    %29 = arith.divf %27, %28 : vector<16x128xf32>
    %30 = arith.subf %7, %10 : vector<16x128xf32>
    %31 = arith.mulf %30, %21 : vector<16x128xf32>
    %32 = arith.addf %31, %10 : vector<16x128xf32>
    %33 = arith.mulf %30, %29 : vector<16x128xf32>
    %34 = arith.addf %33, %10 : vector<16x128xf32>
    %c0_14 = arith.constant 0 : index
    %c0_15 = arith.constant 0 : index
    %35 = vector.load %arg6[%c0_14, %c0_15] : memref<256x128xbf16, #tpu.memory_space<vmem>>, vector<256x128xbf16>
    %36 = arith.truncf %32 : vector<16x128xf32> to vector<16x128xbf16>
    %37 = vector.extract_strided_slice %35 {offsets = [0, 0], sizes = [128, 128], strides = [1, 1]} : vector<256x128xbf16> to vector<128x128xbf16>
    %cst_16 = arith.constant dense<0.000000e+00> : vector<16x128xf32>
    %38 = tpu.matmul %36, %37, %cst_16 {dimension_numbers = #tpu.dot_dimension_numbers<[1], [0], [0], [1], [0, 0, 1, 1], [], []>} : vector<16x128xbf16>, vector<128x128xbf16>, vector<16x128xf32> -> vector<16x128xf32>
    %39 = arith.truncf %34 : vector<16x128xf32> to vector<16x128xbf16>
    %40 = vector.extract_strided_slice %35 {offsets = [128, 0], sizes = [128, 128], strides = [1, 1]} : vector<256x128xbf16> to vector<128x128xbf16>
    %cst_17 = arith.constant dense<0.000000e+00> : vector<16x128xf32>
    %41 = tpu.matmul %39, %40, %cst_17 {dimension_numbers = #tpu.dot_dimension_numbers<[1], [0], [0], [1], [0, 0, 1, 1], [], []>} : vector<16x128xbf16>, vector<128x128xbf16>, vector<16x128xf32> -> vector<16x128xf32>
    %42 = arith.addf %38, %41 : vector<16x128xf32>
    %c0_18 = arith.constant 0 : index
    %c0_19 = arith.constant 0 : index
    %43 = vector.load %arg7[%c0_18, %c0_19] : memref<1x128xf32, #tpu.memory_space<vmem>>, vector<1x128xf32>
    %44 = vector.broadcast %43 : vector<1x128xf32> to vector<16x128xf32>
    %45 = arith.addf %42, %44 : vector<16x128xf32>
    %cst_20 = arith.constant 0.000000e+00 : f32
    %46 = vector.broadcast %cst_20 : f32 to vector<16x128xf32>
    %47 = arith.maximumf %45, %46 : vector<16x128xf32>
    %48 = arith.truncf %47 : vector<16x128xf32> to vector<16x128xbf16>
    %c0_21 = arith.constant 0 : index
    %c0_22 = arith.constant 0 : index
    %49 = vector.load %arg8[%c0_21, %c0_22] : memref<128x128xbf16, #tpu.memory_space<vmem>>, vector<128x128xbf16>
    %cst_23 = arith.constant dense<0.000000e+00> : vector<16x128xf32>
    %50 = tpu.matmul %48, %49, %cst_23 {dimension_numbers = #tpu.dot_dimension_numbers<[1], [0], [0], [1], [0, 0, 1, 1], [], []>} : vector<16x128xbf16>, vector<128x128xbf16>, vector<16x128xf32> -> vector<16x128xf32>
    %c0_24 = arith.constant 0 : index
    %c0_25 = arith.constant 0 : index
    %51 = vector.load %arg9[%c0_24, %c0_25] : memref<1x128xf32, #tpu.memory_space<vmem>>, vector<1x128xf32>
    %52 = vector.broadcast %51 : vector<1x128xf32> to vector<16x128xf32>
    %53 = arith.addf %50, %52 : vector<16x128xf32>
    %54 = arith.truncf %53 : vector<16x128xf32> to vector<16x128xbf16>
    %c0_26 = arith.constant 0 : index
    %c0_27 = arith.constant 0 : index
    %55 = vector.load %arg10[%c0_26, %c0_27] : memref<16x128xbf16, #tpu.memory_space<vmem>>, vector<16x128xbf16>
    tpu.vector_store %arg10[%c0_26, %c0_27], %54 {strides = array<i32>} : memref<16x128xbf16, #tpu.memory_space<vmem>>, vector<16x128xbf16>,
    return
  }
  func.func @transform_0(%arg0: i32) -> (i32, i32) {
    %c0_i32 = arith.constant 0 : i32
    %c0_i32_0 = arith.constant 0 : i32
    return %arg0, %c0_i32 : i32, i32
  }
  func.func @transform_1(%arg0: i32) -> (i32, i32) {
    %c0_i32 = arith.constant 0 : i32
    %c0_i32_0 = arith.constant 0 : i32
    return %arg0, %c0_i32 : i32, i32
  }
  func.func @transform_2(%arg0: i32) -> (i32, i32) {
    %c0_i32 = arith.constant 0 : i32
    %c0_i32_0 = arith.constant 0 : i32
    %c0_i32_1 = arith.constant 0 : i32
    return %c0_i32, %c0_i32_0 : i32, i32
  }
  func.func @transform_3(%arg0: i32) -> (i32, i32) {
    %c0_i32 = arith.constant 0 : i32
    %c0_i32_0 = arith.constant 0 : i32
    %c0_i32_1 = arith.constant 0 : i32
    return %c0_i32, %c0_i32_0 : i32, i32
  }
  func.func @transform_4(%arg0: i32) -> (i32, i32) {
    %c0_i32 = arith.constant 0 : i32
    %c0_i32_0 = arith.constant 0 : i32
    %c0_i32_1 = arith.constant 0 : i32
    return %c0_i32, %c0_i32_0 : i32, i32
  }
  func.func @transform_5(%arg0: i32) -> (i32, i32) {
    %c0_i32 = arith.constant 0 : i32
    %c0_i32_0 = arith.constant 0 : i32
    %c0_i32_1 = arith.constant 0 : i32
    return %c0_i32, %c0_i32_0 : i32, i32
  }
  func.func @transform_6(%arg0: i32) -> (i32, i32) {
    %c0_i32 = arith.constant 0 : i32
    %c0_i32_0 = arith.constant 0 : i32
    %c0_i32_1 = arith.constant 0 : i32
    return %c0_i32, %c0_i32_0 : i32, i32
  }
  func.func @transform_7(%arg0: i32) -> (i32, i32) {
    %c0_i32 = arith.constant 0 : i32
    %c0_i32_0 = arith.constant 0 : i32
    %c0_i32_1 = arith.constant 0 : i32
    return %c0_i32, %c0_i32_0 : i32, i32
  }
  func.func @transform_8(%arg0: i32) -> (i32, i32) {
    %c0_i32 = arith.constant 0 : i32
    %c0_i32_0 = arith.constant 0 : i32
    %c0_i32_1 = arith.constant 0 : i32
    return %c0_i32, %c0_i32_0 : i32, i32
  }
  func.func @transform_9(%arg0: i32) -> (i32, i32) {
    %c0_i32 = arith.constant 0 : i32
    %c0_i32_0 = arith.constant 0 : i32
    return %arg0, %c0_i32 : i32, i32
  }
}

module attributes {stable_mosaic.version = 11 : i64} {
  func.func @_full_self_attention_kernel(%arg0: i32, %arg1: memref<16x128xbf16, #tpu.memory_space<vmem>>, %arg2: memref<16x64xbf16, #tpu.memory_space<vmem>>, %arg3: memref<128x384xbf16, #tpu.memory_space<vmem>>, %arg4: memref<64x384xbf16, #tpu.memory_space<vmem>>, %arg5: memref<128x128xbf16, #tpu.memory_space<vmem>>, %arg6: memref<256x128xbf16, #tpu.memory_space<vmem>>, %arg7: memref<1x128xf32, #tpu.memory_space<vmem>>, %arg8: memref<128x128xbf16, #tpu.memory_space<vmem>>, %arg9: memref<1x128xf32, #tpu.memory_space<vmem>>, %arg10: memref<16x128xbf16, #tpu.memory_space<vmem>>) attributes {dimension_semantics = [#tpu.dimension_semantics<parallel>], iteration_bounds = array<i64: 1>, scalar_prefetch = 0 : i64, scratch_operands = 0 : i64, tpu.core_type = #tpu.core_type<tc>, window_params = [{transform_indices = @transform_0, window_bounds = array<i64: 16, 128>}, {transform_indices = @transform_1, window_bounds = array<i64: 16, 64>}, {pipeline_mode = #tpu.pipeline_mode<synchronous>, transform_indices = @transform_2, window_bounds = array<i64: 128, 384>}, {pipeline_mode = #tpu.pipeline_mode<synchronous>, transform_indices = @transform_3, window_bounds = array<i64: 64, 384>}, {pipeline_mode = #tpu.pipeline_mode<synchronous>, transform_indices = @transform_4, window_bounds = array<i64: 128, 128>}, {pipeline_mode = #tpu.pipeline_mode<synchronous>, transform_indices = @transform_5, window_bounds = array<i64: 256, 128>}, {pipeline_mode = #tpu.pipeline_mode<synchronous>, transform_indices = @transform_6, window_bounds = array<i64: 1, 128>}, {pipeline_mode = #tpu.pipeline_mode<synchronous>, transform_indices = @transform_7, window_bounds = array<i64: 128, 128>}, {pipeline_mode = #tpu.pipeline_mode<synchronous>, transform_indices = @transform_8, window_bounds = array<i64: 1, 128>}, {transform_indices = @transform_9, window_bounds = array<i64: 16, 128>}]} {
    %c0 = arith.constant 0 : index
    %c0_0 = arith.constant 0 : index
    %0 = vector.load %arg1[%c0, %c0_0] : memref<16x128xbf16, #tpu.memory_space<vmem>>, vector<16x128xbf16>
    %c0_1 = arith.constant 0 : index
    %c0_2 = arith.constant 0 : index
    %1 = vector.load %arg2[%c0_1, %c0_2] : memref<16x64xbf16, #tpu.memory_space<vmem>>, vector<16x64xbf16>
    %c0_3 = arith.constant 0 : index
    %c0_4 = arith.constant 0 : index
    %2 = vector.load %arg3[%c0_3, %c0_4] : memref<128x384xbf16, #tpu.memory_space<vmem>>, vector<128x384xbf16>
    %cst = arith.constant dense<0.000000e+00> : vector<16x384xf32>
    %3 = tpu.matmul %0, %2, %cst {dimension_numbers = #tpu.dot_dimension_numbers<[1], [0], [0], [1], [0, 0, 1, 1], [], []>} : vector<16x128xbf16>, vector<128x384xbf16>, vector<16x384xf32> -> vector<16x384xf32>
    %c0_5 = arith.constant 0 : index
    %c0_6 = arith.constant 0 : index
    %4 = vector.load %arg4[%c0_5, %c0_6] : memref<64x384xbf16, #tpu.memory_space<vmem>>, vector<64x384xbf16>
    %cst_7 = arith.constant dense<0.000000e+00> : vector<16x384xf32>
    %5 = tpu.matmul %1, %4, %cst_7 {dimension_numbers = #tpu.dot_dimension_numbers<[1], [0], [0], [1], [0, 0, 1, 1], [], []>} : vector<16x64xbf16>, vector<64x384xbf16>, vector<16x384xf32> -> vector<16x384xf32>
    %6 = vector.extract_strided_slice %3 {offsets = [0, 0], sizes = [16, 128], strides = [1, 1]} : vector<16x384xf32> to vector<16x128xf32>
    %7 = vector.extract_strided_slice %3 {offsets = [0, 128], sizes = [16, 128], strides = [1, 1]} : vector<16x384xf32> to vector<16x128xf32>
    %8 = vector.extract_strided_slice %3 {offsets = [0, 256], sizes = [16, 128], strides = [1, 1]} : vector<16x384xf32> to vector<16x128xf32>
    %9 = vector.extract_strided_slice %5 {offsets = [0, 0], sizes = [16, 128], strides = [1, 1]} : vector<16x384xf32> to vector<16x128xf32>
    %10 = vector.extract_strided_slice %5 {offsets = [0, 128], sizes = [16, 128], strides = [1, 1]} : vector<16x384xf32> to vector<16x128xf32>
    %11 = vector.extract_strided_slice %5 {offsets = [0, 256], sizes = [16, 128], strides = [1, 1]} : vector<16x384xf32> to vector<16x128xf32>
    %12 = arith.subf %8, %11 : vector<16x128xf32>
    %c0_8 = arith.constant 0 : index
    %c0_9 = arith.constant 0 : index
    %13 = vector.load %arg5[%c0_8, %c0_9] : memref<128x128xbf16, #tpu.memory_space<vmem>>, vector<128x128xbf16>
    %14 = arith.mulf %6, %12 : vector<16x128xf32>
    %15 = arith.truncf %14 : vector<16x128xf32> to vector<16x128xbf16>
    %cst_10 = arith.constant dense<0.000000e+00> : vector<16x128xf32>
    %16 = tpu.matmul %15, %13, %cst_10 {dimension_numbers = #tpu.dot_dimension_numbers<[1], [0], [0], [1], [0, 0, 1, 1], [], []>} : vector<16x128xbf16>, vector<128x128xbf16>, vector<16x128xf32> -> vector<16x128xf32>
    %17 = arith.negf %16 : vector<16x128xf32>
    %18 = math.exp %17 : vector<16x128xf32>
    %cst_11 = arith.constant 1.000000e+00 : f32
    %19 = vector.broadcast %cst_11 : f32 to vector<16x128xf32>
    %20 = arith.addf %19, %18 : vector<16x128xf32>
    %21 = arith.divf %19, %20 : vector<16x128xf32>
    %22 = arith.mulf %9, %12 : vector<16x128xf32>
    %23 = arith.truncf %22 : vector<16x128xf32> to vector<16x128xbf16>
    %cst_12 = arith.constant dense<0.000000e+00> : vector<16x128xf32>
    %24 = tpu.matmul %23, %13, %cst_12 {dimension_numbers = #tpu.dot_dimension_numbers<[1], [0], [0], [1], [0, 0, 1, 1], [], []>} : vector<16x128xbf16>, vector<128x128xbf16>, vector<16x128xf32> -> vector<16x128xf32>
    %25 = arith.negf %24 : vector<16x128xf32>
    %26 = math.exp %25 : vector<16x128xf32>
    %cst_13 = arith.constant 1.000000e+00 : f32
    %27 = vector.broadcast %cst_13 : f32 to vector<16x128xf32>
    %28 = arith.addf %27, %26 : vector<16x128xf32>
    %29 = arith.divf %27, %28 : vector<16x128xf32>
    %30 = arith.subf %7, %10 : vector<16x128xf32>
    %31 = arith.mulf %30, %21 : vector<16x128xf32>
    %32 = arith.addf %31, %10 : vector<16x128xf32>
    %33 = arith.mulf %30, %29 : vector<16x128xf32>
    %34 = arith.addf %33, %10 : vector<16x128xf32>
    %c0_14 = arith.constant 0 : index
    %c0_15 = arith.constant 0 : index
    %35 = vector.load %arg6[%c0_14, %c0_15] : memref<256x128xbf16, #tpu.memory_space<vmem>>, vector<256x128xbf16>
    %36 = arith.truncf %32 : vector<16x128xf32> to vector<16x128xbf16>
    %37 = vector.extract_strided_slice %35 {offsets = [0, 0], sizes = [128, 128], strides = [1, 1]} : vector<256x128xbf16> to vector<128x128xbf16>
    %cst_16 = arith.constant dense<0.000000e+00> : vector<16x128xf32>
    %38 = tpu.matmul %36, %37, %cst_16 {dimension_numbers = #tpu.dot_dimension_numbers<[1], [0], [0], [1], [0, 0, 1, 1], [], []>} : vector<16x128xbf16>, vector<128x128xbf16>, vector<16x128xf32> -> vector<16x128xf32>
    %39 = arith.truncf %34 : vector<16x128xf32> to vector<16x128xbf16>
    %40 = vector.extract_strided_slice %35 {offsets = [128, 0], sizes = [128, 128], strides = [1, 1]} : vector<256x128xbf16> to vector<128x128xbf16>
    %cst_17 = arith.constant dense<0.000000e+00> : vector<16x128xf32>
    %41 = tpu.matmul %39, %40, %cst_17 {dimension_numbers = #tpu.dot_dimension_numbers<[1], [0], [0], [1], [0, 0, 1, 1], [], []>} : vector<16x128xbf16>, vector<128x128xbf16>, vector<16x128xf32> -> vector<16x128xf32>
    %42 = arith.addf %38, %41 : vector<16x128xf32>
    %c0_18 = arith.constant 0 : index
    %c0_19 = arith.constant 0 : index
    %43 = vector.load %arg7[%c0_18, %c0_19] : memref<1x128xf32, #tpu.memory_space<vmem>>, vector<1x128xf32>
    %44 = vector.broadcast %43 : vector<1x128xf32> to vector<16x128xf32>
    %45 = arith.addf %42, %44 : vector<16x128xf32>
    %cst_20 = arith.constant 0.000000e+00 : f32
    %46 = vector.broadcast %cst_20 : f32 to vector<16x128xf32>
    %47 = arith.maximumf %45, %46 : vector<16x128xf32>
    %48 = arith.truncf %47 : vector<16x128xf32> to vector<16x128xbf16>
    %c0_21 = arith.constant 0 : index
    %c0_22 = arith.constant 0 : index
    %49 = vector.load %arg8[%c0_21, %c0_22] : memref<128x128xbf16, #tpu.memory_space<vmem>>, vector<128x128xbf16>
    %cst_23 = arith.constant dense<0.000000e+00> : vector<16x128xf32>
    %50 = tpu.matmul %48, %49, %cst_23 {dimension_numbers = #tpu.dot_dimension_numbers<[1], [0], [0], [1], [0, 0, 1, 1], [], []>} : vector<16x128xbf16>, vector<128x128xbf16>, vector<16x128xf32> -> vector<16x128xf32>
    %c0_24 = arith.constant 0 : index
    %c0_25 = arith.constant 0 : index
    %51 = vector.load %arg9[%c0_24, %c0_25] : memref<1x128xf32, #tpu.memory_space<vmem>>, vector<1x128xf32>
    %52 = vector.broadcast %51 : vector<1x128xf32> to vector<16x128xf32>
    %53 = arith.addf %50, %52 : vector<16x128xf32>
    %54 = arith.truncf %53 : vector<16x128xf32> to vector<16x128xbf16>
    %c0_26 = arith.constant 0 : index
    %c0_27 = arith.constant 0 : index
    %55 = vector.load %arg10[%c0_26, %c0_27] : memref<16x128xbf16, #tpu.memory_space<vmem>>, vector<16x128xbf16>
    tpu.vector_store %arg10[%c0_26, %c0_27], %54 {strides = array<i32>} : memref<16x128xbf16, #tpu.memory_space<vmem>>, vector<16x128xbf16>,
    return
  }
  func.func @transform_0(%arg0: i32) -> (i32, i32) {
    %c0_i32 = arith.constant 0 : i32
    %c0_i32_0 = arith.constant 0 : i32
    return %arg0, %c0_i32 : i32, i32
  }
  func.func @transform_1(%arg0: i32) -> (i32, i32) {
    %c0_i32 = arith.constant 0 : i32
    %c0_i32_0 = arith.constant 0 : i32
    return %arg0, %c0_i32 : i32, i32
  }
  func.func @transform_2(%arg0: i32) -> (i32, i32) {
    %c0_i32 = arith.constant 0 : i32
    %c0_i32_0 = arith.constant 0 : i32
    %c0_i32_1 = arith.constant 0 : i32
    return %c0_i32, %c0_i32_0 : i32, i32
  }
  func.func @transform_3(%arg0: i32) -> (i32, i32) {
    %c0_i32 = arith.constant 0 : i32
    %c0_i32_0 = arith.constant 0 : i32
    %c0_i32_1 = arith.constant 0 : i32
    return %c0_i32, %c0_i32_0 : i32, i32
  }
  func.func @transform_4(%arg0: i32) -> (i32, i32) {
    %c0_i32 = arith.constant 0 : i32
    %c0_i32_0 = arith.constant 0 : i32
    %c0_i32_1 = arith.constant 0 : i32
    return %c0_i32, %c0_i32_0 : i32, i32
  }
  func.func @transform_5(%arg0: i32) -> (i32, i32) {
    %c0_i32 = arith.constant 0 : i32
    %c0_i32_0 = arith.constant 0 : i32
    %c0_i32_1 = arith.constant 0 : i32
    return %c0_i32, %c0_i32_0 : i32, i32
  }
  func.func @transform_6(%arg0: i32) -> (i32, i32) {
    %c0_i32 = arith.constant 0 : i32
    %c0_i32_0 = arith.constant 0 : i32
    %c0_i32_1 = arith.constant 0 : i32
    return %c0_i32, %c0_i32_0 : i32, i32
  }
  func.func @transform_7(%arg0: i32) -> (i32, i32) {
    %c0_i32 = arith.constant 0 : i32
    %c0_i32_0 = arith.constant 0 : i32
    %c0_i32_1 = arith.constant 0 : i32
    return %c0_i32, %c0_i32_0 : i32, i32
  }
  func.func @transform_8(%arg0: i32) -> (i32, i32) {
    %c0_i32 = arith.constant 0 : i32
    %c0_i32_0 = arith.constant 0 : i32
    %c0_i32_1 = arith.constant 0 : i32
    return %c0_i32, %c0_i32_0 : i32, i32
  }
  func.func @transform_9(%arg0: i32) -> (i32, i32) {
    %c0_i32 = arith.constant 0 : i32
    %c0_i32_0 = arith.constant 0 : i32
    return %arg0, %c0_i32 : i32, i32
  }
}

</mosaic_0001>

<llo_original>
// kernel: tpu_custom_call.1
$region0: #{tpu_custom_call.1}
  #allocation0 [shape = 'u32[]', space=smem, size = 0x4, offset = 0x4, fixed_abs, tag = 'smem constant byte address 0x4 - core index']
  #allocation1 [shape = 'u32[144,128]{1,0:T(1,128)}', space=vmem, size = 0x12000, scoped, tag = 'internal scratch']
  %s0 = inlined_call_operand.hbm [shape: bf16[16,128], index: 0, kind: input, shape index: {}]
  %s1 = inlined_call_operand.hbm [shape: bf16[16,64], index: 1, kind: input, shape index: {}]
  %s2 = inlined_call_operand.hbm [shape: bf16[128,384], index: 2, kind: input, shape index: {}]
  %s3 = inlined_call_operand.hbm [shape: bf16[64,384], index: 3, kind: input, shape index: {}]
  %s4 = inlined_call_operand.hbm [shape: bf16[128,128], index: 4, kind: input, shape index: {}]
  %s5 = inlined_call_operand.hbm [shape: bf16[256,128], index: 5, kind: input, shape index: {}]
  %s6 = inlined_call_operand.hbm [shape: f32[1,128], index: 6, kind: input, shape index: {}]
  %s7 = inlined_call_operand.hbm [shape: bf16[128,128], index: 7, kind: input, shape index: {}]
  %s8 = inlined_call_operand.hbm [shape: f32[1,128], index: 8, kind: input, shape index: {}]
  %s9 = inlined_call_operand.hbm [shape: bf16[16,128], index: 9, kind: output, shape index: {}]
  %s10 = sld [smem:[#allocation0]]
  $region82: #{tpu_custom_call.1} parent=0
    _
  %s12 = ssub.s32 1, %s10
  %s13 = scalar_select 0, %s12, %s10
  $region1: #{tpu_custom_call.1} parent=0
    #allocation2 [shape = 'u8[4096]{0}', space=vmem, size = 0x1000, scoped, tag = 'input window, operand 0, single buffered']
    #allocation3 [shape = 's32[1]{0}', space=sflag, size = 0x4, scoped, tag = 'scoped memory for tpu_custom_call.1']
    #allocation4 [shape = 's32[1]{0}', space=sflag, size = 0x4, scoped, tag = 'scoped memory for tpu_custom_call.1']
    #allocation5 [shape = 'u8[4096]{0}', space=vmem, size = 0x1000, scoped, tag = 'input window, operand 1, single buffered']
    #allocation6 [shape = 's32[1]{0}', space=sflag, size = 0x4, scoped, tag = 'scoped memory for tpu_custom_call.1']
    #allocation7 [shape = 'u8[98304]{0}', space=vmem, size = 0x18000, scoped, tag = 'input window, operand 2, single buffered']
    #allocation8 [shape = 'u8[49152]{0}', space=vmem, size = 0xc000, scoped, tag = 'input window, operand 3, single buffered']
    #allocation9 [shape = 's32[1]{0}', space=sflag, size = 0x4, scoped, tag = 'scoped memory for tpu_custom_call.1']
    #allocation10 [shape = 'u8[32768]{0}', space=vmem, size = 0x8000, scoped, tag = 'input window, operand 4, single buffered']
    #allocation11 [shape = 'u8[65536]{0}', space=vmem, size = 0x10000, scoped, tag = 'input window, operand 5, single buffered']
    #allocation12 [shape = 's32[1]{0}', space=sflag, size = 0x4, scoped, tag = 'scoped memory for tpu_custom_call.1']
    #allocation13 [shape = 'u8[512]{0}', space=vmem, size = 0x400, scoped, tag = 'input window, operand 6, single buffered']
    #allocation14 [shape = 'u8[32768]{0}', space=vmem, size = 0x8000, scoped, tag = 'input window, operand 7, single buffered']
    #allocation15 [shape = 's32[1]{0}', space=sflag, size = 0x4, scoped, tag = 'scoped memory for tpu_custom_call.1']
    #allocation16 [shape = 'u8[512]{0}', space=vmem, size = 0x400, scoped, tag = 'input window, operand 8, single buffered']
    #allocation17 [shape = 'u8[4096]{0}', space=vmem, size = 0x1000, scoped, tag = 'output window, operand 0, single buffered']
    %14 = vsyncpa [#allocation3], 0
    %15 = vsyncpa [#allocation6], 0
    %16 = vsyncpa [#allocation9], 0
    %17 = vsyncpa [#allocation12], 0
    %18 = vsyncpa [#allocation15], 0
    %19 = vsyncpa [#allocation4], 0
    // Predicated region
    $region2: #{tpu_custom_call.1} parent=1 // pred_check
      _
    $region3: #{tpu_custom_call.1} parent=1 // pred_check_branch
      %21 = sbr.rel (0) target = $region5
    $region4: #{tpu_custom_call.1} parent=1 // pred_region
      %s23 = ssub.s32 128, 128
      %24 = vsyncadd [#allocation3], %s23
      %s25 = sshll.u32 [#allocation2], 4
      %s26 = int_to_ptr.vmem [resolvable:$true] %s25
      %31 = dma.hbm_to_vmem [thread:$0]  %s0, 128, %s26, [#allocation3], 64, 64, 4
    $region5: #{tpu_custom_call.1} parent=1 // pred_fallthru
      _
    // Predicated region
    $region6: #{tpu_custom_call.1} parent=1 // pred_check
      _
    $region7: #{tpu_custom_call.1} parent=1 // pred_check_branch
      %33 = sbr.rel (0) target = $region9
    $region8: #{tpu_custom_call.1} parent=1 // pred_region
      %s35 = ssub.s32 128, 128
      %36 = vsyncadd [#allocation6], %s35
      %s37 = sshll.u32 [#allocation5], 4
      %s38 = int_to_ptr.vmem [resolvable:$true] %s37
      %43 = dma.hbm_to_vmem [thread:$0]  %s1, 128, %s38, [#allocation6], 64, 64, 4
    $region9: #{tpu_custom_call.1} parent=1 // pred_fallthru
      _
    // Predicated region
    $region10: #{tpu_custom_call.1} parent=1 // pred_check
      _
    $region11: #{tpu_custom_call.1} parent=1 // pred_check_branch
      %45 = sbr.rel (0) target = $region13
    $region12: #{tpu_custom_call.1} parent=1 // pred_region
      %s47 = ssub.s32 3072, 3072
      %48 = vsyncadd [#allocation6], %s47
      %s49 = sshll.u32 [#allocation7], 4
      %s50 = int_to_ptr.vmem [resolvable:$true] %s49
      %55 = dma.hbm_to_vmem [thread:$0]  %s2, 3072, %s50, [#allocation6], 192, 192, 12
    $region13: #{tpu_custom_call.1} parent=1 // pred_fallthru
      _
    // Predicated region
    $region14: #{tpu_custom_call.1} parent=1 // pred_check
      _
    $region15: #{tpu_custom_call.1} parent=1 // pred_check_branch
      %57 = sbr.rel (0) target = $region17
    $region16: #{tpu_custom_call.1} parent=1 // pred_region
      %s59 = ssub.s32 1536, 1536
      %60 = vsyncadd [#allocation9], %s59
      %s61 = sshll.u32 [#allocation8], 4
      %s62 = int_to_ptr.vmem [resolvable:$true] %s61
      %67 = dma.hbm_to_vmem [thread:$0]  %s3, 1536, %s62, [#allocation9], 192, 192, 12
    $region17: #{tpu_custom_call.1} parent=1 // pred_fallthru
      _
    // Predicated region
    $region18: #{tpu_custom_call.1} parent=1 // pred_check
      _
    $region19: #{tpu_custom_call.1} parent=1 // pred_check_branch
      %69 = sbr.rel (0) target = $region21
    $region20: #{tpu_custom_call.1} parent=1 // pred_region
      %s71 = ssub.s32 1024, 1024
      %72 = vsyncadd [#allocation9], %s71
      %s73 = sshll.u32 [#allocation10], 4
      %s74 = int_to_ptr.vmem [resolvable:$true] %s73
      %79 = dma.hbm_to_vmem [thread:$0]  %s4, 1024, %s74, [#allocation9], 64, 64, 4
    $region21: #{tpu_custom_call.1} parent=1 // pred_fallthru
      _
    // Predicated region
    $region22: #{tpu_custom_call.1} parent=1 // pred_check
      _
    $region23: #{tpu_custom_call.1} parent=1 // pred_check_branch
      %81 = sbr.rel (0) target = $region25
    $region24: #{tpu_custom_call.1} parent=1 // pred_region
      %s83 = ssub.s32 2048, 2048
      %84 = vsyncadd [#allocation12], %s83
      %s85 = sshll.u32 [#allocation11], 4
      %s86 = int_to_ptr.vmem [resolvable:$true] %s85
      %91 = dma.hbm_to_vmem [thread:$0]  %s5, 2048, %s86, [#allocation12], 64, 64, 4
    $region25: #{tpu_custom_call.1} parent=1 // pred_fallthru
      _
    // Predicated region
    $region26: #{tpu_custom_call.1} parent=1 // pred_check
      _
    $region27: #{tpu_custom_call.1} parent=1 // pred_check_branch
      %93 = sbr.rel (0) target = $region29
    $region28: #{tpu_custom_call.1} parent=1 // pred_region
      %s95 = ssub.s32 16, 16
      %96 = vsyncadd [#allocation12], %s95
      %s98 = sshll.u32 [#allocation13], 4
      %s99 = int_to_ptr.vmem [resolvable:$true] %s98
      %101 = dma.hbm_to_vmem [thread:$0]  %s6, 16, %s99, [#allocation12]
    $region29: #{tpu_custom_call.1} parent=1 // pred_fallthru
      _
    // Predicated region
    $region30: #{tpu_custom_call.1} parent=1 // pred_check
      _
    $region31: #{tpu_custom_call.1} parent=1 // pred_check_branch
      %103 = sbr.rel (0) target = $region33
    $region32: #{tpu_custom_call.1} parent=1 // pred_region
      %s105 = ssub.s32 1024, 1024
      %106 = vsyncadd [#allocation15], %s105
      %s107 = sshll.u32 [#allocation14], 4
      %s108 = int_to_ptr.vmem [resolvable:$true] %s107
      %113 = dma.hbm_to_vmem [thread:$0]  %s7, 1024, %s108, [#allocation15], 64, 64, 4
    $region33: #{tpu_custom_call.1} parent=1 // pred_fallthru
      _
    // Predicated region
    $region34: #{tpu_custom_call.1} parent=1 // pred_check
      _
    $region35: #{tpu_custom_call.1} parent=1 // pred_check_branch
      %115 = sbr.rel (0) target = $region37
    $region36: #{tpu_custom_call.1} parent=1 // pred_region
      %s117 = ssub.s32 16, 16
      %118 = vsyncadd [#allocation15], %s117
      %s120 = sshll.u32 [#allocation16], 4
      %s121 = int_to_ptr.vmem [resolvable:$true] %s120
      %123 = dma.hbm_to_vmem [thread:$0]  %s8, 16, %s121, [#allocation15]
    $region37: #{tpu_custom_call.1} parent=1 // pred_fallthru
      _
    // Predicated region
    $region38: #{tpu_custom_call.1} parent=1 // pred_check
      _
    $region39: #{tpu_custom_call.1} parent=1 // pred_check_branch
      %125 = sbr.rel (0) target = $region41
    $region40: #{tpu_custom_call.1} parent=1 // pred_region
      %126 = dma.done [#allocation3], 128
    $region41: #{tpu_custom_call.1} parent=1 // pred_fallthru
      _
    // Predicated region
    $region42: #{tpu_custom_call.1} parent=1 // pred_check
      _
    $region43: #{tpu_custom_call.1} parent=1 // pred_check_branch
      %128 = sbr.rel (0) target = $region45
    $region44: #{tpu_custom_call.1} parent=1 // pred_region
      %129 = dma.done [#allocation6], 128
    $region45: #{tpu_custom_call.1} parent=1 // pred_fallthru
      _
    // Predicated region
    $region46: #{tpu_custom_call.1} parent=1 // pred_check
      _
    $region47: #{tpu_custom_call.1} parent=1 // pred_check_branch
      %131 = sbr.rel (0) target = $region49
    $region48: #{tpu_custom_call.1} parent=1 // pred_region
      %132 = dma.done [#allocation6], 3072
    $region49: #{tpu_custom_call.1} parent=1 // pred_fallthru
      _
    // Predicated region
    $region50: #{tpu_custom_call.1} parent=1 // pred_check
      _
    $region51: #{tpu_custom_call.1} parent=1 // pred_check_branch
      %134 = sbr.rel (0) target = $region53
    $region52: #{tpu_custom_call.1} parent=1 // pred_region
      %135 = dma.done [#allocation9], 1536
    $region53: #{tpu_custom_call.1} parent=1 // pred_fallthru
      _
    // Predicated region
    $region54: #{tpu_custom_call.1} parent=1 // pred_check
      _
    $region55: #{tpu_custom_call.1} parent=1 // pred_check_branch
      %137 = sbr.rel (0) target = $region57
    $region56: #{tpu_custom_call.1} parent=1 // pred_region
      %138 = dma.done [#allocation9], 1024
    $region57: #{tpu_custom_call.1} parent=1 // pred_fallthru
      _
    // Predicated region
    $region58: #{tpu_custom_call.1} parent=1 // pred_check
      _
    $region59: #{tpu_custom_call.1} parent=1 // pred_check_branch
      %140 = sbr.rel (0) target = $region61
    $region60: #{tpu_custom_call.1} parent=1 // pred_region
      %141 = dma.done [#allocation12], 2048
    $region61: #{tpu_custom_call.1} parent=1 // pred_fallthru
      _
    // Predicated region
    $region62: #{tpu_custom_call.1} parent=1 // pred_check
      _
    $region63: #{tpu_custom_call.1} parent=1 // pred_check_branch
      %143 = sbr.rel (0) target = $region65
    $region64: #{tpu_custom_call.1} parent=1 // pred_region
      %144 = dma.done [#allocation12], 16
    $region65: #{tpu_custom_call.1} parent=1 // pred_fallthru
      _
    // Predicated region
    $region66: #{tpu_custom_call.1} parent=1 // pred_check
      _
    $region67: #{tpu_custom_call.1} parent=1 // pred_check_branch
      %146 = sbr.rel (0) target = $region69
    $region68: #{tpu_custom_call.1} parent=1 // pred_region
      %147 = dma.done [#allocation15], 1024
    $region69: #{tpu_custom_call.1} parent=1 // pred_fallthru
      _
    // Predicated region
    $region70: #{tpu_custom_call.1} parent=1 // pred_check
      _
    $region71: #{tpu_custom_call.1} parent=1 // pred_check_branch
      %149 = sbr.rel (0) target = $region73
    $region72: #{tpu_custom_call.1} parent=1 // pred_region
      %150 = dma.done [#allocation15], 16
    $region73: #{tpu_custom_call.1} parent=1 // pred_fallthru
      _
    %v152 = vld [vmem:[#allocation2] sm:$0xf]
    %v153 = vld [vmem:[#allocation2 + $0x4] sm:$0xf]
    %v154 = vld [vmem:[#allocation5] sm:$0xf]
    %v155 = vld [vmem:[#allocation5 + $0x4] sm:$0xf]
    %v156 = vld [vmem:[#allocation7] sm:$0xff]
    %v157 = vld [vmem:[#allocation7 + $0x8] sm:$0xf]
    %v158 = vld [vmem:[#allocation7 + $0xc] sm:$0xff]
    %v159 = vld [vmem:[#allocation7 + $0x14] sm:$0xf]
    %v160 = vld [vmem:[#allocation7 + $0x18] sm:$0xff]
    %v161 = vld [vmem:[#allocation7 + $0x20] sm:$0xf]
    %v162 = vld [vmem:[#allocation7 + $0x24] sm:$0xff]
    %v163 = vld [vmem:[#allocation7 + $0x2c] sm:$0xf]
    %v164 = vld [vmem:[#allocation7 + $0x30] sm:$0xff]
    %v165 = vld [vmem:[#allocation7 + $0x38] sm:$0xf]
    %v166 = vld [vmem:[#allocation7 + $0x3c] sm:$0xff]
    %v167 = vld [vmem:[#allocation7 + $0x44] sm:$0xf]
    %v168 = vld [vmem:[#allocation7 + $0x48] sm:$0xff]
    %v169 = vld [vmem:[#allocation7 + $0x50] sm:$0xf]
    %v170 = vld [vmem:[#allocation7 + $0x54] sm:$0xff]
    %v171 = vld [vmem:[#allocation7 + $0x5c] sm:$0xf]
    %v172 = vld [vmem:[#allocation7 + $0x60] sm:$0xff]
    %v173 = vld [vmem:[#allocation7 + $0x68] sm:$0xf]
    %v174 = vld [vmem:[#allocation7 + $0x6c] sm:$0xff]
    %v175 = vld [vmem:[#allocation7 + $0x74] sm:$0xf]
    %v176 = vld [vmem:[#allocation7 + $0x78] sm:$0xff]
    %v177 = vld [vmem:[#allocation7 + $0x80] sm:$0xf]
    %v178 = vld [vmem:[#allocation7 + $0x84] sm:$0xff]
    %v179 = vld [vmem:[#allocation7 + $0x8c] sm:$0xf]
    %v180 = vld [vmem:[#allocation7 + $0x90] sm:$0xff]
    %v181 = vld [vmem:[#allocation7 + $0x98] sm:$0xf]
    %v182 = vld [vmem:[#allocation7 + $0x9c] sm:$0xff]
    %v183 = vld [vmem:[#allocation7 + $0xa4] sm:$0xf]
    %v184 = vld [vmem:[#allocation7 + $0xa8] sm:$0xff]
    %v185 = vld [vmem:[#allocation7 + $0xb0] sm:$0xf]
    %v186 = vld [vmem:[#allocation7 + $0xb4] sm:$0xff]
    %v187 = vld [vmem:[#allocation7 + $0xbc] sm:$0xf]
    %v190 = vunpack.c.l.b16 %v152
    %v191 = vunpack.c.l.b16 %v153
    %v192 = vpack.c.b16 %v191, %v190
    %v226 = vunpack.c.l.b16 %v156
    %v227 = vunpack.c.h.b16 %v156
    %v228 = vunpack.c.l.b16 %v157
    %v229 = vunpack.c.l.b16 %v158
    %v230 = vunpack.c.h.b16 %v158
    %v231 = vunpack.c.l.b16 %v159
    %v232 = vunpack.c.l.b16 %v160
    %v233 = vunpack.c.h.b16 %v160
    %v234 = vunpack.c.l.b16 %v161
    %v235 = vunpack.c.l.b16 %v162
    %v236 = vunpack.c.h.b16 %v162
    %v237 = vunpack.c.l.b16 %v163
    %v238 = vunpack.c.l.b16 %v164
    %v239 = vunpack.c.h.b16 %v164
    %v240 = vunpack.c.l.b16 %v165
    %v241 = vunpack.c.l.b16 %v166
    %v242 = vunpack.c.h.b16 %v166
    %v243 = vunpack.c.l.b16 %v167
    %v244 = vunpack.c.l.b16 %v168
    %v245 = vunpack.c.h.b16 %v168
    %v246 = vunpack.c.l.b16 %v169
    %v247 = vunpack.c.l.b16 %v170
    %v248 = vunpack.c.h.b16 %v170
    %v249 = vunpack.c.l.b16 %v171
    %v250 = vunpack.c.l.b16 %v172
    %v251 = vunpack.c.h.b16 %v172
    %v252 = vunpack.c.l.b16 %v173
    %v253 = vunpack.c.l.b16 %v174
    %v254 = vunpack.c.h.b16 %v174
    %v255 = vunpack.c.l.b16 %v175
    %v256 = vunpack.c.l.b16 %v176
    %v257 = vunpack.c.h.b16 %v176
    %v258 = vunpack.c.l.b16 %v177
    %v259 = vunpack.c.l.b16 %v178
    %v260 = vunpack.c.h.b16 %v178
    %v261 = vunpack.c.l.b16 %v179
    %v262 = vunpack.c.l.b16 %v180
    %v263 = vunpack.c.h.b16 %v180
    %v264 = vunpack.c.l.b16 %v181
    %v265 = vunpack.c.l.b16 %v182
    %v266 = vunpack.c.h.b16 %v182
    %v267 = vunpack.c.l.b16 %v183
    %v268 = vunpack.c.l.b16 %v184
    %v269 = vunpack.c.h.b16 %v184
    %v270 = vunpack.c.l.b16 %v185
    %v271 = vunpack.c.l.b16 %v186
    %v272 = vunpack.c.h.b16 %v186
    %v273 = vunpack.c.l.b16 %v187
    %v274 = vpack.c.b16 %v229, %v226
    %v275 = vpack.c.b16 %v230, %v227
    %v276 = vpack.c.b16 %v231, %v228
    %v277 = vpack.c.b16 %v235, %v232
    %v278 = vpack.c.b16 %v236, %v233
    %v279 = vpack.c.b16 %v237, %v234
    %v280 = vpack.c.b16 %v241, %v238
    %v281 = vpack.c.b16 %v242, %v239
    %v282 = vpack.c.b16 %v243, %v240
    %v283 = vpack.c.b16 %v247, %v244
    %v284 = vpack.c.b16 %v248, %v245
    %v285 = vpack.c.b16 %v249, %v246
    %v286 = vpack.c.b16 %v253, %v250
    %v287 = vpack.c.b16 %v254, %v251
    %v288 = vpack.c.b16 %v255, %v252
    %v289 = vpack.c.b16 %v259, %v256
    %v290 = vpack.c.b16 %v260, %v257
    %v291 = vpack.c.b16 %v261, %v258
    %v292 = vpack.c.b16 %v265, %v262
    %v293 = vpack.c.b16 %v266, %v263
    %v294 = vpack.c.b16 %v267, %v264
    %v295 = vpack.c.b16 %v271, %v268
    %v296 = vpack.c.b16 %v272, %v269
    %v297 = vpack.c.b16 %v273, %v270
    %322 = vmatprep.subr.bf16.mxu0 %v275
    %323 = vmatpush1.bf16.msra.mxu0 %v274
    %324 = vmatprep.subr.bf16.mxu0 %v278
    %325 = vmatpush1.bf16.msra.mxu0 %v277
    %326 = vmatprep.subr.bf16.mxu0 %v281
    %327 = vmatpush1.bf16.msra.mxu0 %v280
    %328 = vmatprep.subr.bf16.mxu0 %v284
    %329 = vmatpush1.bf16.msra.mxu0 %v283
    %330 = vmatprep.subr.bf16.mxu0 %v287
    %331 = vmatpush1.bf16.msra.mxu0 %v286
    %332 = vmatprep.subr.bf16.mxu0 %v290
    %333 = vmatpush1.bf16.msra.mxu0 %v289
    %334 = vmatprep.subr.bf16.mxu0 %v293
    %335 = vmatpush1.bf16.msra.mxu0 %v292
    %336 = vmatprep.subr.bf16.mxu0 %v296
    %337 = vmatpush1.bf16.msra.mxu0 %v295
    %338 = vmatprep.subr.bf16.mxu0 0
    %339 = vmatpush1.bf16.msra.mxu0 0
    %340 = vmatprep.subr.bf16.mxu0 0
    %341 = vmatpush1.bf16.msra.mxu0 0
    %342 = vmatprep.subr.bf16.mxu0 0
    %343 = vmatpush1.bf16.msra.mxu0 0
    %344 = vmatprep.subr.bf16.mxu0 0
    %345 = vmatpush1.bf16.msra.mxu0 0
    %346 = vmatprep.subr.bf16.mxu0 0
    %347 = vmatpush1.bf16.msra.mxu0 0
    %348 = vmatprep.subr.bf16.mxu0 0
    %349 = vmatpush1.bf16.msra.mxu0 0
    %350 = vmatprep.subr.bf16.mxu0 0
    %351 = vmatpush1.bf16.msra.mxu0 0
    %352 = vmatprep.subr.bf16.mxu0 0
    %353 = vmatpush1.bf16.msra.mxu0 0
    %354 = vmatprep.mubr.bf16.mxu0 0
    %355 = vmatmul.mubr.bf16.gmra.mrb[0].mxu0 %v192
    %v356 = vpop.f32.mrb[0].mxu0
    %v357 = vadd.f32 0.0, %v356
    %v358 = vpop.f32.mrb[0].mxu0
    %v359 = vadd.f32 0.0, %v358
    %v360 = vpop.f32.mrb[0].mxu0
    %v361 = vadd.f32 0.0, %v360
    %v362 = vpop.f32.mrb[0].mxu0
    %v363 = vadd.f32 0.0, %v362
    %364 = vdwg.mxu0
    %365 = vmatprep.subr.bf16.mxu0 0
    %366 = vmatpush1.bf16.msra.mxu0 %v276
    %367 = vmatprep.subr.bf16.mxu0 0
    %368 = vmatpush1.bf16.msra.mxu0 %v279
    %369 = vmatprep.subr.bf16.mxu0 0
    %370 = vmatpush1.bf16.msra.mxu0 %v282
    %371 = vmatprep.subr.bf16.mxu0 0
    %372 = vmatpush1.bf16.msra.mxu0 %v285
    %373 = vmatprep.subr.bf16.mxu0 0
    %374 = vmatpush1.bf16.msra.mxu0 %v288
    %375 = vmatprep.subr.bf16.mxu0 0
    %376 = vmatpush1.bf16.msra.mxu0 %v291
    %377 = vmatprep.subr.bf16.mxu0 0
    %378 = vmatpush1.bf16.msra.mxu0 %v294
    %379 = vmatprep.subr.bf16.mxu0 0
    %380 = vmatpush1.bf16.msra.mxu0 %v297
    %381 = vmatprep.subr.bf16.mxu0 0
    %382 = vmatpush1.bf16.msra.mxu0 0
    %383 = vmatprep.subr.bf16.mxu0 0
    %384 = vmatpush1.bf16.msra.mxu0 0
    %385 = vmatprep.subr.bf16.mxu0 0
    %386 = vmatpush1.bf16.msra.mxu0 0
    %387 = vmatprep.subr.bf16.mxu0 0
    %388 = vmatpush1.bf16.msra.mxu0 0
    %389 = vmatprep.subr.bf16.mxu0 0
    %390 = vmatpush1.bf16.msra.mxu0 0
    %391 = vmatprep.subr.bf16.mxu0 0
    %392 = vmatpush1.bf16.msra.mxu0 0
    %393 = vmatprep.subr.bf16.mxu0 0
    %394 = vmatpush1.bf16.msra.mxu0 0
    %395 = vmatprep.subr.bf16.mxu0 0
    %396 = vmatpush1.bf16.msra.mxu0 0
    %397 = vmatprep.mubr.bf16.mxu0 0
    %398 = vmatmul.mubr.bf16.gmra.mrb[0].mxu0 %v192
    %v399 = vpop.f32.mrb[0].mxu0
    %v400 = vadd.f32 0.0, %v399
    %v401 = vpop.f32.mrb[0].mxu0
    %v402 = vpop.f32.mrb[0].mxu0
    %v403 = vadd.f32 0.0, %v402
    %v404 = vpop.f32.mrb[0].mxu0
    %405 = vdwg.mxu0
    %v406 = vld [vmem:[#allocation8] sm:$0xff]
    %v407 = vld [vmem:[#allocation8 + $0x8] sm:$0xf]
    %v408 = vld [vmem:[#allocation8 + $0xc] sm:$0xff]
    %v409 = vld [vmem:[#allocation8 + $0x14] sm:$0xf]
    %v410 = vld [vmem:[#allocation8 + $0x18] sm:$0xff]
    %v411 = vld [vmem:[#allocation8 + $0x20] sm:$0xf]
    %v412 = vld [vmem:[#allocation8 + $0x24] sm:$0xff]
    %v413 = vld [vmem:[#allocation8 + $0x2c] sm:$0xf]
    %v414 = vld [vmem:[#allocation8 + $0x30] sm:$0xff]
    %v415 = vld [vmem:[#allocation8 + $0x38] sm:$0xf]
    %v416 = vld [vmem:[#allocation8 + $0x3c] sm:$0xff]
    %v417 = vld [vmem:[#allocation8 + $0x44] sm:$0xf]
    %v418 = vld [vmem:[#allocation8 + $0x48] sm:$0xff]
    %v419 = vld [vmem:[#allocation8 + $0x50] sm:$0xf]
    %v420 = vld [vmem:[#allocation8 + $0x54] sm:$0xff]
    %v421 = vld [vmem:[#allocation8 + $0x5c] sm:$0xf]
    %v424 = vunpack.c.l.b16 %v154
    %v425 = vunpack.c.l.b16 %v155
    %v426 = vpack.c.b16 %v425, %v424
    %v443 = vunpack.c.l.b16 %v406
    %v444 = vunpack.c.h.b16 %v406
    %v445 = vunpack.c.l.b16 %v407
    %v446 = vunpack.c.l.b16 %v408
    %v447 = vunpack.c.h.b16 %v408
    %v448 = vunpack.c.l.b16 %v409
    %v449 = vunpack.c.l.b16 %v410
    %v450 = vunpack.c.h.b16 %v410
    %v451 = vunpack.c.l.b16 %v411
    %v452 = vunpack.c.l.b16 %v412
    %v453 = vunpack.c.h.b16 %v412
    %v454 = vunpack.c.l.b16 %v413
    %v455 = vunpack.c.l.b16 %v414
    %v456 = vunpack.c.h.b16 %v414
    %v457 = vunpack.c.l.b16 %v415
    %v458 = vunpack.c.l.b16 %v416
    %v459 = vunpack.c.h.b16 %v416
    %v460 = vunpack.c.l.b16 %v417
    %v461 = vunpack.c.l.b16 %v418
    %v462 = vunpack.c.h.b16 %v418
    %v463 = vunpack.c.l.b16 %v419
    %v464 = vunpack.c.l.b16 %v420
    %v465 = vunpack.c.h.b16 %v420
    %v466 = vunpack.c.l.b16 %v421
    %v467 = vpack.c.b16 %v446, %v443
    %v468 = vpack.c.b16 %v447, %v444
    %v469 = vpack.c.b16 %v448, %v445
    %v470 = vpack.c.b16 %v452, %v449
    %v471 = vpack.c.b16 %v453, %v450
    %v472 = vpack.c.b16 %v454, %v451
    %v473 = vpack.c.b16 %v458, %v455
    %v474 = vpack.c.b16 %v459, %v456
    %v475 = vpack.c.b16 %v460, %v457
    %v476 = vpack.c.b16 %v464, %v461
    %v477 = vpack.c.b16 %v465, %v462
    %v478 = vpack.c.b16 %v466, %v463
    %vm491 = vcmask 523264
    %v493 = vsel %vm491, %v426, 0
    %495 = vmatprep.subr.bf16.mxu0 %v468
    %496 = vmatpush1.bf16.msra.mxu0 %v467
    %497 = vmatprep.subr.bf16.mxu0 %v471
    %498 = vmatpush1.bf16.msra.mxu0 %v470
    %499 = vmatprep.subr.bf16.mxu0 %v474
    %500 = vmatpush1.bf16.msra.mxu0 %v473
    %501 = vmatprep.subr.bf16.mxu0 %v477
    %502 = vmatpush1.bf16.msra.mxu0 %v476
    %503 = vmatprep.subr.bf16.mxu0 0
    %504 = vmatpush1.bf16.msra.mxu0 0
    %505 = vmatprep.subr.bf16.mxu0 0
    %506 = vmatpush1.bf16.msra.mxu0 0
    %507 = vmatprep.subr.bf16.mxu0 0
    %508 = vmatpush1.bf16.msra.mxu0 0
    %509 = vmatprep.subr.bf16.mxu0 0
    %510 = vmatpush1.bf16.msra.mxu0 0
    %511 = vmatprep.subr.bf16.mxu0 0
    %512 = vmatpush1.bf16.msra.mxu0 0
    %513 = vmatprep.subr.bf16.mxu0 0
    %514 = vmatpush1.bf16.msra.mxu0 0
    %515 = vmatprep.subr.bf16.mxu0 0
    %516 = vmatpush1.bf16.msra.mxu0 0
    %517 = vmatprep.subr.bf16.mxu0 0
    %518 = vmatpush1.bf16.msra.mxu0 0
    %519 = vmatprep.subr.bf16.mxu0 0
    %520 = vmatpush1.bf16.msra.mxu0 0
    %521 = vmatprep.subr.bf16.mxu0 0
    %522 = vmatpush1.bf16.msra.mxu0 0
    %523 = vmatprep.subr.bf16.mxu0 0
    %524 = vmatpush1.bf16.msra.mxu0 0
    %525 = vmatprep.subr.bf16.mxu0 0
    %526 = vmatpush1.bf16.msra.mxu0 0
    %527 = vmatprep.mubr.bf16.mxu0 0
    %528 = vmatmul.mubr.bf16.gmra.mrb[0].mxu0 %v493
    %v529 = vpop.f32.mrb[0].mxu0
    %v530 = vadd.f32 0.0, %v529
    %v531 = vpop.f32.mrb[0].mxu0
    %v532 = vadd.f32 0.0, %v531
    %v533 = vpop.f32.mrb[0].mxu0
    %v534 = vadd.f32 0.0, %v533
    %v535 = vpop.f32.mrb[0].mxu0
    %v536 = vadd.f32 0.0, %v535
    %537 = vdwg.mxu0
    %538 = vmatprep.subr.bf16.mxu0 0
    %539 = vmatpush1.bf16.msra.mxu0 %v469
    %540 = vmatprep.subr.bf16.mxu0 0
    %541 = vmatpush1.bf16.msra.mxu0 %v472
    %542 = vmatprep.subr.bf16.mxu0 0
    %543 = vmatpush1.bf16.msra.mxu0 %v475
    %544 = vmatprep.subr.bf16.mxu0 0
    %545 = vmatpush1.bf16.msra.mxu0 %v478
    %546 = vmatprep.subr.bf16.mxu0 0
    %547 = vmatpush1.bf16.msra.mxu0 0
    %548 = vmatprep.subr.bf16.mxu0 0
    %549 = vmatpush1.bf16.msra.mxu0 0
    %550 = vmatprep.subr.bf16.mxu0 0
    %551 = vmatpush1.bf16.msra.mxu0 0
    %552 = vmatprep.subr.bf16.mxu0 0
    %553 = vmatpush1.bf16.msra.mxu0 0
    %554 = vmatprep.subr.bf16.mxu0 0
    %555 = vmatpush1.bf16.msra.mxu0 0
    %556 = vmatprep.subr.bf16.mxu0 0
    %557 = vmatpush1.bf16.msra.mxu0 0
    %558 = vmatprep.subr.bf16.mxu0 0
    %559 = vmatpush1.bf16.msra.mxu0 0
    %560 = vmatprep.subr.bf16.mxu0 0
    %561 = vmatpush1.bf16.msra.mxu0 0
    %562 = vmatprep.subr.bf16.mxu0 0
    %563 = vmatpush1.bf16.msra.mxu0 0
    %564 = vmatprep.subr.bf16.mxu0 0
    %565 = vmatpush1.bf16.msra.mxu0 0
    %566 = vmatprep.subr.bf16.mxu0 0
    %567 = vmatpush1.bf16.msra.mxu0 0
    %568 = vmatprep.subr.bf16.mxu0 0
    %569 = vmatpush1.bf16.msra.mxu0 0
    %570 = vmatprep.mubr.bf16.mxu0 0
    %571 = vmatmul.mubr.bf16.gmra.mrb[0].mxu0 %v493
    %v572 = vpop.f32.mrb[0].mxu0
    %v573 = vadd.f32 0.0, %v572
    %v574 = vpop.f32.mrb[0].mxu0
    %v575 = vpop.f32.mrb[0].mxu0
    %v576 = vadd.f32 0.0, %v575
    %v577 = vpop.f32.mrb[0].mxu0
    %578 = vdwg.mxu0
    %v579 = vsub.f32 %v400, %v573
    %v580 = vsub.f32 %v403, %v576
    %v581 = vld [vmem:[#allocation10] sm:$0xf]
    %v582 = vld [vmem:[#allocation10 + $0x4] sm:$0xf]
    %v583 = vld [vmem:[#allocation10 + $0x8] sm:$0xf]
    %v584 = vld [vmem:[#allocation10 + $0xc] sm:$0xf]
    %v585 = vld [vmem:[#allocation10 + $0x10] sm:$0xf]
    %v586 = vld [vmem:[#allocation10 + $0x14] sm:$0xf]
    %v587 = vld [vmem:[#allocation10 + $0x18] sm:$0xf]
    %v588 = vld [vmem:[#allocation10 + $0x1c] sm:$0xf]
    %v589 = vld [vmem:[#allocation10 + $0x20] sm:$0xf]
    %v590 = vld [vmem:[#allocation10 + $0x24] sm:$0xf]
    %v591 = vld [vmem:[#allocation10 + $0x28] sm:$0xf]
    %v592 = vld [vmem:[#allocation10 + $0x2c] sm:$0xf]
    %v593 = vld [vmem:[#allocation10 + $0x30] sm:$0xf]
    %v594 = vld [vmem:[#allocation10 + $0x34] sm:$0xf]
    %v595 = vld [vmem:[#allocation10 + $0x38] sm:$0xf]
    %v596 = vld [vmem:[#allocation10 + $0x3c] sm:$0xf]
    %v597 = vmul.f32 %v357, %v579
    %v598 = vmul.f32 %v361, %v580
    %v599 = vpack.c.bf16 %v598, %v597
    %v616 = vunpack.c.l.b16 %v581
    %v617 = vunpack.c.l.b16 %v582
    %v618 = vunpack.c.l.b16 %v583
    %v619 = vunpack.c.l.b16 %v584
    %v620 = vunpack.c.l.b16 %v585
    %v621 = vunpack.c.l.b16 %v586
    %v622 = vunpack.c.l.b16 %v587
    %v623 = vunpack.c.l.b16 %v588
    %v624 = vunpack.c.l.b16 %v589
    %v625 = vunpack.c.l.b16 %v590
    %v626 = vunpack.c.l.b16 %v591
    %v627 = vunpack.c.l.b16 %v592
    %v628 = vunpack.c.l.b16 %v593
    %v629 = vunpack.c.l.b16 %v594
    %v630 = vunpack.c.l.b16 %v595
    %v631 = vunpack.c.l.b16 %v596
    %v632 = vpack.c.b16 %v617, %v616
    %v633 = vpack.c.b16 %v619, %v618
    %v634 = vpack.c.b16 %v621, %v620
    %v635 = vpack.c.b16 %v623, %v622
    %v636 = vpack.c.b16 %v625, %v624
    %v637 = vpack.c.b16 %v627, %v626
    %v638 = vpack.c.b16 %v629, %v628
    %v639 = vpack.c.b16 %v631, %v630
    %648 = vmatprep.subr.bf16.mxu0 0
    %649 = vmatpush1.bf16.msra.mxu0 %v632
    %650 = vmatprep.subr.bf16.mxu0 0
    %651 = vmatpush1.bf16.msra.mxu0 %v633
    %652 = vmatprep.subr.bf16.mxu0 0
    %653 = vmatpush1.bf16.msra.mxu0 %v634
    %654 = vmatprep.subr.bf16.mxu0 0
    %655 = vmatpush1.bf16.msra.mxu0 %v635
    %656 = vmatprep.subr.bf16.mxu0 0
    %657 = vmatpush1.bf16.msra.mxu0 %v636
    %658 = vmatprep.subr.bf16.mxu0 0
    %659 = vmatpush1.bf16.msra.mxu0 %v637
    %660 = vmatprep.subr.bf16.mxu0 0
    %661 = vmatpush1.bf16.msra.mxu0 %v638
    %662 = vmatprep.subr.bf16.mxu0 0
    %663 = vmatpush1.bf16.msra.mxu0 %v639
    %664 = vmatprep.subr.bf16.mxu0 0
    %665 = vmatpush1.bf16.msra.mxu0 0
    %666 = vmatprep.subr.bf16.mxu0 0
    %667 = vmatpush1.bf16.msra.mxu0 0
    %668 = vmatprep.subr.bf16.mxu0 0
    %669 = vmatpush1.bf16.msra.mxu0 0
    %670 = vmatprep.subr.bf16.mxu0 0
    %671 = vmatpush1.bf16.msra.mxu0 0
    %672 = vmatprep.subr.bf16.mxu0 0
    %673 = vmatpush1.bf16.msra.mxu0 0
    %674 = vmatprep.subr.bf16.mxu0 0
    %675 = vmatpush1.bf16.msra.mxu0 0
    %676 = vmatprep.subr.bf16.mxu0 0
    %677 = vmatpush1.bf16.msra.mxu0 0
    %678 = vmatprep.subr.bf16.mxu0 0
    %679 = vmatpush1.bf16.msra.mxu0 0
    %680 = vmatprep.mubr.bf16.mxu0 0
    %681 = vmatmul.mubr.bf16.gmra.mrb[0].mxu0 %v599
    %v682 = vpop.f32.mrb[0].mxu0
    %v683 = vadd.f32 0.0, %v682
    %v684 = vpop.f32.mrb[0].mxu0
    %v685 = vpop.f32.mrb[0].mxu0
    %v686 = vadd.f32 0.0, %v685
    %v687 = vpop.f32.mrb[0].mxu0
    %688 = vdwg.mxu0
    %v689 = vxor.u32 %v683, 2147483648
    %v690 = vxor.u32 %v686, 2147483648
    %v691 = vmul.f32 %v689, 1.442695
    %v692 = vpow.pop %v691
    %v693 = vmul.f32 %v690, 1.442695
    %v694 = vpow.pop %v693
    %v695 = vadd.f32 %v692, 1.0
    %v696 = vadd.f32 %v694, 1.0
    %v697 = vrcp.pop %v695
    %v698 = vmul.f32 1.0, %v697
    %v699 = vrcp.pop %v696
    %v700 = vmul.f32 1.0, %v699
    %v701 = vmul.f32 %v530, %v579
    %v702 = vmul.f32 %v534, %v580
    %v703 = vpack.c.bf16 %v702, %v701
    %704 = vmatprep.subr.bf16.mxu0 0
    %705 = vmatpush1.bf16.msra.mxu0 %v632
    %706 = vmatprep.subr.bf16.mxu0 0
    %707 = vmatpush1.bf16.msra.mxu0 %v633
    %708 = vmatprep.subr.bf16.mxu0 0
    %709 = vmatpush1.bf16.msra.mxu0 %v634
    %710 = vmatprep.subr.bf16.mxu0 0
    %711 = vmatpush1.bf16.msra.mxu0 %v635
    %712 = vmatprep.subr.bf16.mxu0 0
    %713 = vmatpush1.bf16.msra.mxu0 %v636
    %714 = vmatprep.subr.bf16.mxu0 0
    %715 = vmatpush1.bf16.msra.mxu0 %v637
    %716 = vmatprep.subr.bf16.mxu0 0
    %717 = vmatpush1.bf16.msra.mxu0 %v638
    %718 = vmatprep.subr.bf16.mxu0 0
    %719 = vmatpush1.bf16.msra.mxu0 %v639
    %720 = vmatprep.subr.bf16.mxu0 0
    %721 = vmatpush1.bf16.msra.mxu0 0
    %722 = vmatprep.subr.bf16.mxu0 0
    %723 = vmatpush1.bf16.msra.mxu0 0
    %724 = vmatprep.subr.bf16.mxu0 0
    %725 = vmatpush1.bf16.msra.mxu0 0
    %726 = vmatprep.subr.bf16.mxu0 0
    %727 = vmatpush1.bf16.msra.mxu0 0
    %728 = vmatprep.subr.bf16.mxu0 0
    %729 = vmatpush1.bf16.msra.mxu0 0
    %730 = vmatprep.subr.bf16.mxu0 0
    %731 = vmatpush1.bf16.msra.mxu0 0
    %732 = vmatprep.subr.bf16.mxu0 0
    %733 = vmatpush1.bf16.msra.mxu0 0
    %734 = vmatprep.subr.bf16.mxu0 0
    %735 = vmatpush1.bf16.msra.mxu0 0
    %736 = vmatprep.mubr.bf16.mxu0 0
    %737 = vmatmul.mubr.bf16.gmra.mrb[0].mxu0 %v703
    %v738 = vpop.f32.mrb[0].mxu0
    %v739 = vadd.f32 0.0, %v738
    %v740 = vpop.f32.mrb[0].mxu0
    %v741 = vpop.f32.mrb[0].mxu0
    %v742 = vadd.f32 0.0, %v741
    %v743 = vpop.f32.mrb[0].mxu0
    %744 = vdwg.mxu0
    %v745 = vxor.u32 %v739, 2147483648
    %v746 = vxor.u32 %v742, 2147483648
    %v747 = vmul.f32 %v745, 1.442695
    %v748 = vpow.pop %v747
    %v749 = vmul.f32 %v746, 1.442695
    %v750 = vpow.pop %v749
    %v751 = vadd.f32 %v748, 1.0
    %v752 = vadd.f32 %v750, 1.0
    %v753 = vrcp.pop %v751
    %v754 = vmul.f32 1.0, %v753
    %v755 = vrcp.pop %v752
    %v756 = vmul.f32 1.0, %v755
    %v757 = vsub.f32 %v359, %v532
    %v758 = vsub.f32 %v363, %v536
    %v759 = vmul.f32 %v757, %v698
    %v760 = vmul.f32 %v758, %v700
    %v761 = vadd.f32 %v759, %v532
    %v762 = vadd.f32 %v760, %v536
    %v763 = vmul.f32 %v757, %v754
    %v764 = vmul.f32 %v758, %v756
    %v765 = vadd.f32 %v763, %v532
    %v766 = vadd.f32 %v764, %v536
    %v767 = vld [vmem:[#allocation11] sm:$0xf]
    %v768 = vld [vmem:[#allocation11 + $0x4] sm:$0xf]
    %v769 = vld [vmem:[#allocation11 + $0x8] sm:$0xf]
    %v770 = vld [vmem:[#allocation11 + $0xc] sm:$0xf]
    %v771 = vld [vmem:[#allocation11 + $0x10] sm:$0xf]
    %v772 = vld [vmem:[#allocation11 + $0x14] sm:$0xf]
    %v773 = vld [vmem:[#allocation11 + $0x18] sm:$0xf]
    %v774 = vld [vmem:[#allocation11 + $0x1c] sm:$0xf]
    %v775 = vld [vmem:[#allocation11 + $0x20] sm:$0xf]
    %v776 = vld [vmem:[#allocation11 + $0x24] sm:$0xf]
    %v777 = vld [vmem:[#allocation11 + $0x28] sm:$0xf]
    %v778 = vld [vmem:[#allocation11 + $0x2c] sm:$0xf]
    %v779 = vld [vmem:[#allocation11 + $0x30] sm:$0xf]
    %v780 = vld [vmem:[#allocation11 + $0x34] sm:$0xf]
    %v781 = vld [vmem:[#allocation11 + $0x38] sm:$0xf]
    %v782 = vld [vmem:[#allocation11 + $0x3c] sm:$0xf]
    %v783 = vld [vmem:[#allocation11 + $0x40] sm:$0xf]
    %v784 = vld [vmem:[#allocation11 + $0x44] sm:$0xf]
    %v785 = vld [vmem:[#allocation11 + $0x48] sm:$0xf]
    %v786 = vld [vmem:[#allocation11 + $0x4c] sm:$0xf]
    %v787 = vld [vmem:[#allocation11 + $0x50] sm:$0xf]
    %v788 = vld [vmem:[#allocation11 + $0x54] sm:$0xf]
    %v789 = vld [vmem:[#allocation11 + $0x58] sm:$0xf]
    %v790 = vld [vmem:[#allocation11 + $0x5c] sm:$0xf]
    %v791 = vld [vmem:[#allocation11 + $0x60] sm:$0xf]
    %v792 = vld [vmem:[#allocation11 + $0x64] sm:$0xf]
    %v793 = vld [vmem:[#allocation11 + $0x68] sm:$0xf]
    %v794 = vld [vmem:[#allocation11 + $0x6c] sm:$0xf]
    %v795 = vld [vmem:[#allocation11 + $0x70] sm:$0xf]
    %v796 = vld [vmem:[#allocation11 + $0x74] sm:$0xf]
    %v797 = vld [vmem:[#allocation11 + $0x78] sm:$0xf]
    %v798 = vld [vmem:[#allocation11 + $0x7c] sm:$0xf]
    %v799 = vpack.c.bf16 %v762, %v761
    %v800 = vpack.c.bf16 %v766, %v765
    %v817 = vunpack.c.l.b16 %v783
    %v818 = vunpack.c.l.b16 %v784
    %v819 = vunpack.c.l.b16 %v785
    %v820 = vunpack.c.l.b16 %v786
    %v821 = vunpack.c.l.b16 %v787
    %v822 = vunpack.c.l.b16 %v788
    %v823 = vunpack.c.l.b16 %v789
    %v824 = vunpack.c.l.b16 %v790
    %v825 = vunpack.c.l.b16 %v791
    %v826 = vunpack.c.l.b16 %v792
    %v827 = vunpack.c.l.b16 %v793
    %v828 = vunpack.c.l.b16 %v794
    %v829 = vunpack.c.l.b16 %v795
    %v830 = vunpack.c.l.b16 %v796
    %v831 = vunpack.c.l.b16 %v797
    %v832 = vunpack.c.l.b16 %v798
    %v833 = vpack.c.b16 %v818, %v817
    %v834 = vpack.c.b16 %v820, %v819
    %v835 = vpack.c.b16 %v822, %v821
    %v836 = vpack.c.b16 %v824, %v823
    %v837 = vpack.c.b16 %v826, %v825
    %v838 = vpack.c.b16 %v828, %v827
    %v839 = vpack.c.b16 %v830, %v829
    %v840 = vpack.c.b16 %v832, %v831
    %849 = vmatprep.subr.bf16.mxu0 0
    %850 = vmatpush1.bf16.msra.mxu0 %v833
    %851 = vmatprep.subr.bf16.mxu0 0
    %852 = vmatpush1.bf16.msra.mxu0 %v834
    %853 = vmatprep.subr.bf16.mxu0 0
    %854 = vmatpush1.bf16.msra.mxu0 %v835
    %855 = vmatprep.subr.bf16.mxu0 0
    %856 = vmatpush1.bf16.msra.mxu0 %v836
    %857 = vmatprep.subr.bf16.mxu0 0
    %858 = vmatpush1.bf16.msra.mxu0 %v837
    %859 = vmatprep.subr.bf16.mxu0 0
    %860 = vmatpush1.bf16.msra.mxu0 %v838
    %861 = vmatprep.subr.bf16.mxu0 0
    %862 = vmatpush1.bf16.msra.mxu0 %v839
    %863 = vmatprep.subr.bf16.mxu0 0
    %864 = vmatpush1.bf16.msra.mxu0 %v840
    %865 = vmatprep.subr.bf16.mxu0 0
    %866 = vmatpush1.bf16.msra.mxu0 0
    %867 = vmatprep.subr.bf16.mxu0 0
    %868 = vmatpush1.bf16.msra.mxu0 0
    %869 = vmatprep.subr.bf16.mxu0 0
    %870 = vmatpush1.bf16.msra.mxu0 0
    %871 = vmatprep.subr.bf16.mxu0 0
    %872 = vmatpush1.bf16.msra.mxu0 0
    %873 = vmatprep.subr.bf16.mxu0 0
    %874 = vmatpush1.bf16.msra.mxu0 0
    %875 = vmatprep.subr.bf16.mxu0 0
    %876 = vmatpush1.bf16.msra.mxu0 0
    %877 = vmatprep.subr.bf16.mxu0 0
    %878 = vmatpush1.bf16.msra.mxu0 0
    %879 = vmatprep.subr.bf16.mxu0 0
    %880 = vmatpush1.bf16.msra.mxu0 0
    %881 = vmatprep.mubr.bf16.mxu0 0
    %882 = vmatmul.mubr.bf16.gmra.mrb[0].mxu0 %v800
    %v883 = vpop.f32.mrb[0].mxu0
    %v884 = vadd.f32 0.0, %v883
    %v885 = vpop.f32.mrb[0].mxu0
    %v886 = vpop.f32.mrb[0].mxu0
    %v887 = vadd.f32 0.0, %v886
    %v888 = vpop.f32.mrb[0].mxu0
    %889 = vdwg.mxu0
    %v906 = vunpack.c.l.b16 %v767
    %v907 = vunpack.c.l.b16 %v768
    %v908 = vunpack.c.l.b16 %v769
    %v909 = vunpack.c.l.b16 %v770
    %v910 = vunpack.c.l.b16 %v771
    %v911 = vunpack.c.l.b16 %v772
    %v912 = vunpack.c.l.b16 %v773
    %v913 = vunpack.c.l.b16 %v774
    %v914 = vunpack.c.l.b16 %v775
    %v915 = vunpack.c.l.b16 %v776
    %v916 = vunpack.c.l.b16 %v777
    %v917 = vunpack.c.l.b16 %v778
    %v918 = vunpack.c.l.b16 %v779
    %v919 = vunpack.c.l.b16 %v780
    %v920 = vunpack.c.l.b16 %v781
    %v921 = vunpack.c.l.b16 %v782
    %v922 = vpack.c.b16 %v907, %v906
    %v923 = vpack.c.b16 %v909, %v908
    %v924 = vpack.c.b16 %v911, %v910
    %v925 = vpack.c.b16 %v913, %v912
    %v926 = vpack.c.b16 %v915, %v914
    %v927 = vpack.c.b16 %v917, %v916
    %v928 = vpack.c.b16 %v919, %v918
    %v929 = vpack.c.b16 %v921, %v920
    %938 = vmatprep.subr.bf16.mxu0 0
    %939 = vmatpush1.bf16.msra.mxu0 %v922
    %940 = vmatprep.subr.bf16.mxu0 0
    %941 = vmatpush1.bf16.msra.mxu0 %v923
    %942 = vmatprep.subr.bf16.mxu0 0
    %943 = vmatpush1.bf16.msra.mxu0 %v924
    %944 = vmatprep.subr.bf16.mxu0 0
    %945 = vmatpush1.bf16.msra.mxu0 %v925
    %946 = vmatprep.subr.bf16.mxu0 0
    %947 = vmatpush1.bf16.msra.mxu0 %v926
    %948 = vmatprep.subr.bf16.mxu0 0
    %949 = vmatpush1.bf16.msra.mxu0 %v927
    %950 = vmatprep.subr.bf16.mxu0 0
    %951 = vmatpush1.bf16.msra.mxu0 %v928
    %952 = vmatprep.subr.bf16.mxu0 0
    %953 = vmatpush1.bf16.msra.mxu0 %v929
    %954 = vmatprep.subr.bf16.mxu0 0
    %955 = vmatpush1.bf16.msra.mxu0 0
    %956 = vmatprep.subr.bf16.mxu0 0
    %957 = vmatpush1.bf16.msra.mxu0 0
    %958 = vmatprep.subr.bf16.mxu0 0
    %959 = vmatpush1.bf16.msra.mxu0 0
    %960 = vmatprep.subr.bf16.mxu0 0
    %961 = vmatpush1.bf16.msra.mxu0 0
    %962 = vmatprep.subr.bf16.mxu0 0
    %963 = vmatpush1.bf16.msra.mxu0 0
    %964 = vmatprep.subr.bf16.mxu0 0
    %965 = vmatpush1.bf16.msra.mxu0 0
    %966 = vmatprep.subr.bf16.mxu0 0
    %967 = vmatpush1.bf16.msra.mxu0 0
    %968 = vmatprep.subr.bf16.mxu0 0
    %969 = vmatpush1.bf16.msra.mxu0 0
    %970 = vmatprep.mubr.bf16.mxu0 0
    %971 = vmatmul.mubr.bf16.gmra.mrb[0].mxu0 %v799
    %v972 = vpop.f32.mrb[0].mxu0
    %v973 = vadd.f32 %v884, %v972
    %v974 = vpop.f32.mrb[0].mxu0
    %v975 = vpop.f32.mrb[0].mxu0
    %v976 = vadd.f32 %v887, %v975
    %v977 = vpop.f32.mrb[0].mxu0
    %978 = vdwg.mxu0
    %v979 = vld [vmem:[#allocation13] sm:$0x1]
    %v981 = vlaneseq
    %v982 = vshrl.u32 %v981, 7
    %v983 = vsub.s32 0, %v982
    %v984 = vrot.slane %v979, %v983
    %v986 = vadd.f32 %v973, %v984
    %v987 = vadd.f32 %v976, %v984
    %v988 = vmax.f32 %v986, 0.0
    %v989 = vmax.f32 %v987, 0.0
    %v990 = vpack.c.bf16 %v989, %v988
    %v991 = vld [vmem:[#allocation14] sm:$0xf]
    %v992 = vld [vmem:[#allocation14 + $0x4] sm:$0xf]
    %v993 = vld [vmem:[#allocation14 + $0x8] sm:$0xf]
    %v994 = vld [vmem:[#allocation14 + $0xc] sm:$0xf]
    %v995 = vld [vmem:[#allocation14 + $0x10] sm:$0xf]
    %v996 = vld [vmem:[#allocation14 + $0x14] sm:$0xf]
    %v997 = vld [vmem:[#allocation14 + $0x18] sm:$0xf]
    %v998 = vld [vmem:[#allocation14 + $0x1c] sm:$0xf]
    %v999 = vld [vmem:[#allocation14 + $0x20] sm:$0xf]
    %v1000 = vld [vmem:[#allocation14 + $0x24] sm:$0xf]
    %v1001 = vld [vmem:[#allocation14 + $0x28] sm:$0xf]
    %v1002 = vld [vmem:[#allocation14 + $0x2c] sm:$0xf]
    %v1003 = vld [vmem:[#allocation14 + $0x30] sm:$0xf]
    %v1004 = vld [vmem:[#allocation14 + $0x34] sm:$0xf]
    %v1005 = vld [vmem:[#allocation14 + $0x38] sm:$0xf]
    %v1006 = vld [vmem:[#allocation14 + $0x3c] sm:$0xf]
    %v1007 = vld [vmem:[#allocation16] sm:$0x1]
    %v1009 = vlaneseq
    %v1010 = vshrl.u32 %v1009, 7
    %v1011 = vsub.s32 0, %v1010
    %v1012 = vrot.slane %v1007, %v1011
    %v1030 = vunpack.c.l.b16 %v991
    %v1031 = vunpack.c.l.b16 %v992
    %v1032 = vunpack.c.l.b16 %v993
    %v1033 = vunpack.c.l.b16 %v994
    %v1034 = vunpack.c.l.b16 %v995
    %v1035 = vunpack.c.l.b16 %v996
    %v1036 = vunpack.c.l.b16 %v997
    %v1037 = vunpack.c.l.b16 %v998
    %v1038 = vunpack.c.l.b16 %v999
    %v1039 = vunpack.c.l.b16 %v1000
    %v1040 = vunpack.c.l.b16 %v1001
    %v1041 = vunpack.c.l.b16 %v1002
    %v1042 = vunpack.c.l.b16 %v1003
    %v1043 = vunpack.c.l.b16 %v1004
    %v1044 = vunpack.c.l.b16 %v1005
    %v1045 = vunpack.c.l.b16 %v1006
    %v1046 = vpack.c.b16 %v1031, %v1030
    %v1047 = vpack.c.b16 %v1033, %v1032
    %v1048 = vpack.c.b16 %v1035, %v1034
    %v1049 = vpack.c.b16 %v1037, %v1036
    %v1050 = vpack.c.b16 %v1039, %v1038
    %v1051 = vpack.c.b16 %v1041, %v1040
    %v1052 = vpack.c.b16 %v1043, %v1042
    %v1053 = vpack.c.b16 %v1045, %v1044
    %1062 = vmatprep.subr.bf16.mxu0 0
    %1063 = vmatpush1.bf16.msra.mxu0 %v1046
    %1064 = vmatprep.subr.bf16.mxu0 0
    %1065 = vmatpush1.bf16.msra.mxu0 %v1047
    %1066 = vmatprep.subr.bf16.mxu0 0
    %1067 = vmatpush1.bf16.msra.mxu0 %v1048
    %1068 = vmatprep.subr.bf16.mxu0 0
    %1069 = vmatpush1.bf16.msra.mxu0 %v1049
    %1070 = vmatprep.subr.bf16.mxu0 0
    %1071 = vmatpush1.bf16.msra.mxu0 %v1050
    %1072 = vmatprep.subr.bf16.mxu0 0
    %1073 = vmatpush1.bf16.msra.mxu0 %v1051
    %1074 = vmatprep.subr.bf16.mxu0 0
    %1075 = vmatpush1.bf16.msra.mxu0 %v1052
    %1076 = vmatprep.subr.bf16.mxu0 0
    %1077 = vmatpush1.bf16.msra.mxu0 %v1053
    %1078 = vmatprep.subr.bf16.mxu0 0
    %1079 = vmatpush1.bf16.msra.mxu0 0
    %1080 = vmatprep.subr.bf16.mxu0 0
    %1081 = vmatpush1.bf16.msra.mxu0 0
    %1082 = vmatprep.subr.bf16.mxu0 0
    %1083 = vmatpush1.bf16.msra.mxu0 0
    %1084 = vmatprep.subr.bf16.mxu0 0
    %1085 = vmatpush1.bf16.msra.mxu0 0
    %1086 = vmatprep.subr.bf16.mxu0 0
    %1087 = vmatpush1.bf16.msra.mxu0 0
    %1088 = vmatprep.subr.bf16.mxu0 0
    %1089 = vmatpush1.bf16.msra.mxu0 0
    %1090 = vmatprep.subr.bf16.mxu0 0
    %1091 = vmatpush1.bf16.msra.mxu0 0
    %1092 = vmatprep.subr.bf16.mxu0 0
    %1093 = vmatpush1.bf16.msra.mxu0 0
    %1094 = vmatprep.mubr.bf16.mxu0 0
    %1095 = vmatmul.mubr.bf16.gmra.mrb[0].mxu0 %v990
    %v1096 = vpop.f32.mrb[0].mxu0
    %v1097 = vadd.f32 %v1012, %v1096
    %v1098 = vpop.f32.mrb[0].mxu0
    %v1099 = vpop.f32.mrb[0].mxu0
    %v1100 = vadd.f32 %v1012, %v1099
    %v1101 = vpop.f32.mrb[0].mxu0
    %1102 = vdwg.mxu0
    %v1103 = vpack.c.bf16 %v1100, %v1097
    %v1105 = vunpack.c.l.b16 %v1103
    %v1106 = vunpack.c.h.b16 %v1103
    %v1107 = vpack.c.b16 %v1105, %v1105
    %v1108 = vpack.c.b16 %v1106, %v1106
    %1111 = vst [vmem:[#allocation17] sm:$0xf] %v1107
    %1112 = vst [vmem:[#allocation17 + $0x4] sm:$0xf] %v1108
    // Predicated region
    $region74: #{tpu_custom_call.1} parent=1 // pred_check
      _
    $region75: #{tpu_custom_call.1} parent=1 // pred_check_branch
      %1114 = sbr.rel (0) target = $region77
    $region76: #{tpu_custom_call.1} parent=1 // pred_region
      %s1116 = ssub.s32 128, 128
      %1117 = vsyncadd [#allocation4], %s1116
      %s1118 = sshll.u32 [#allocation17], 4
      %s1119 = int_to_ptr.vmem [resolvable:$true] %s1118
      %1124 = dma.vmem_to_hbm [thread:$0]  %s1119, 128, %s9, [#allocation4], 64, 64, 4
    $region77: #{tpu_custom_call.1} parent=1 // pred_fallthru
      _
    // Predicated region
    $region78: #{tpu_custom_call.1} parent=1 // pred_check
      _
    $region79: #{tpu_custom_call.1} parent=1 // pred_check_branch
      %1126 = sbr.rel (0) target = $region81
    $region80: #{tpu_custom_call.1} parent=1 // pred_region
      %1127 = dma.done [#allocation4], 128
    $region81: #{tpu_custom_call.1} parent=1 // pred_fallthru
      _
    %1128 = vsyncpa [#allocation3], 1
    %1129 = vsyncpa [#allocation6], 1
    %1130 = vsyncpa [#allocation9], 1
    %1131 = vsyncpa [#allocation12], 1
    %1132 = vsyncpa [#allocation15], 1
    %1133 = vsyncpa [#allocation4], 1

// kernel: tpu_custom_call.1
$region0: #{tpu_custom_call.1}
  #allocation0 [shape = 'u32[]', space=smem, size = 0x4, offset = 0x4, fixed_abs, tag = 'smem constant byte address 0x4 - core index']
  #allocation1 [shape = 'u32[144,128]{1,0:T(1,128)}', space=vmem, size = 0x12000, scoped, tag = 'internal scratch']
  %s0 = inlined_call_operand.hbm [shape: bf16[16,128], index: 0, kind: input, shape index: {}]
  %s1 = inlined_call_operand.hbm [shape: bf16[16,64], index: 1, kind: input, shape index: {}]
  %s2 = inlined_call_operand.hbm [shape: bf16[128,384], index: 2, kind: input, shape index: {}]
  %s3 = inlined_call_operand.hbm [shape: bf16[64,384], index: 3, kind: input, shape index: {}]
  %s4 = inlined_call_operand.hbm [shape: bf16[128,128], index: 4, kind: input, shape index: {}]
  %s5 = inlined_call_operand.hbm [shape: bf16[256,128], index: 5, kind: input, shape index: {}]
  %s6 = inlined_call_operand.hbm [shape: f32[1,128], index: 6, kind: input, shape index: {}]
  %s7 = inlined_call_operand.hbm [shape: bf16[128,128], index: 7, kind: input, shape index: {}]
  %s8 = inlined_call_operand.hbm [shape: f32[1,128], index: 8, kind: input, shape index: {}]
  %s9 = inlined_call_operand.hbm [shape: bf16[16,128], index: 9, kind: output, shape index: {}]
  %s10 = sld [smem:[#allocation0]]
  $region82: #{tpu_custom_call.1} parent=0
    _
  %s12 = ssub.s32 1, %s10
  %s13 = scalar_select 0, %s12, %s10
  $region1: #{tpu_custom_call.1} parent=0
    #allocation2 [shape = 'u8[4096]{0}', space=vmem, size = 0x1000, scoped, tag = 'input window, operand 0, single buffered']
    #allocation3 [shape = 's32[1]{0}', space=sflag, size = 0x4, scoped, tag = 'scoped memory for tpu_custom_call.1']
    #allocation4 [shape = 's32[1]{0}', space=sflag, size = 0x4, scoped, tag = 'scoped memory for tpu_custom_call.1']
    #allocation5 [shape = 'u8[4096]{0}', space=vmem, size = 0x1000, scoped, tag = 'input window, operand 1, single buffered']
    #allocation6 [shape = 's32[1]{0}', space=sflag, size = 0x4, scoped, tag = 'scoped memory for tpu_custom_call.1']
    #allocation7 [shape = 'u8[98304]{0}', space=vmem, size = 0x18000, scoped, tag = 'input window, operand 2, single buffered']
    #allocation8 [shape = 'u8[49152]{0}', space=vmem, size = 0xc000, scoped, tag = 'input window, operand 3, single buffered']
    #allocation9 [shape = 's32[1]{0}', space=sflag, size = 0x4, scoped, tag = 'scoped memory for tpu_custom_call.1']
    #allocation10 [shape = 'u8[32768]{0}', space=vmem, size = 0x8000, scoped, tag = 'input window, operand 4, single buffered']
    #allocation11 [shape = 'u8[65536]{0}', space=vmem, size = 0x10000, scoped, tag = 'input window, operand 5, single buffered']
    #allocation12 [shape = 's32[1]{0}', space=sflag, size = 0x4, scoped, tag = 'scoped memory for tpu_custom_call.1']
    #allocation13 [shape = 'u8[512]{0}', space=vmem, size = 0x400, scoped, tag = 'input window, operand 6, single buffered']
    #allocation14 [shape = 'u8[32768]{0}', space=vmem, size = 0x8000, scoped, tag = 'input window, operand 7, single buffered']
    #allocation15 [shape = 's32[1]{0}', space=sflag, size = 0x4, scoped, tag = 'scoped memory for tpu_custom_call.1']
    #allocation16 [shape = 'u8[512]{0}', space=vmem, size = 0x400, scoped, tag = 'input window, operand 8, single buffered']
    #allocation17 [shape = 'u8[4096]{0}', space=vmem, size = 0x1000, scoped, tag = 'output window, operand 0, single buffered']
    %14 = vsyncpa [#allocation3], 0
    %15 = vsyncpa [#allocation6], 0
    %16 = vsyncpa [#allocation9], 0
    %17 = vsyncpa [#allocation12], 0
    %18 = vsyncpa [#allocation15], 0
    %19 = vsyncpa [#allocation4], 0
    // Predicated region
    $region2: #{tpu_custom_call.1} parent=1 // pred_check
      _
    $region3: #{tpu_custom_call.1} parent=1 // pred_check_branch
      %21 = sbr.rel (0) target = $region5
    $region4: #{tpu_custom_call.1} parent=1 // pred_region
      %s23 = ssub.s32 128, 128
      %24 = vsyncadd [#allocation3], %s23
      %s25 = sshll.u32 [#allocation2], 4
      %s26 = int_to_ptr.vmem [resolvable:$true] %s25
      %31 = dma.hbm_to_vmem [thread:$0]  %s0, 128, %s26, [#allocation3], 64, 64, 4
    $region5: #{tpu_custom_call.1} parent=1 // pred_fallthru
      _
    // Predicated region
    $region6: #{tpu_custom_call.1} parent=1 // pred_check
      _
    $region7: #{tpu_custom_call.1} parent=1 // pred_check_branch
      %33 = sbr.rel (0) target = $region9
    $region8: #{tpu_custom_call.1} parent=1 // pred_region
      %s35 = ssub.s32 128, 128
      %36 = vsyncadd [#allocation6], %s35
      %s37 = sshll.u32 [#allocation5], 4
      %s38 = int_to_ptr.vmem [resolvable:$true] %s37
      %43 = dma.hbm_to_vmem [thread:$0]  %s1, 128, %s38, [#allocation6], 64, 64, 4
    $region9: #{tpu_custom_call.1} parent=1 // pred_fallthru
      _
    // Predicated region
    $region10: #{tpu_custom_call.1} parent=1 // pred_check
      _
    $region11: #{tpu_custom_call.1} parent=1 // pred_check_branch
      %45 = sbr.rel (0) target = $region13
    $region12: #{tpu_custom_call.1} parent=1 // pred_region
      %s47 = ssub.s32 3072, 3072
      %48 = vsyncadd [#allocation6], %s47
      %s49 = sshll.u32 [#allocation7], 4
      %s50 = int_to_ptr.vmem [resolvable:$true] %s49
      %55 = dma.hbm_to_vmem [thread:$0]  %s2, 3072, %s50, [#allocation6], 192, 192, 12
    $region13: #{tpu_custom_call.1} parent=1 // pred_fallthru
      _
    // Predicated region
    $region14: #{tpu_custom_call.1} parent=1 // pred_check
      _
    $region15: #{tpu_custom_call.1} parent=1 // pred_check_branch
      %57 = sbr.rel (0) target = $region17
    $region16: #{tpu_custom_call.1} parent=1 // pred_region
      %s59 = ssub.s32 1536, 1536
      %60 = vsyncadd [#allocation9], %s59
      %s61 = sshll.u32 [#allocation8], 4
      %s62 = int_to_ptr.vmem [resolvable:$true] %s61
      %67 = dma.hbm_to_vmem [thread:$0]  %s3, 1536, %s62, [#allocation9], 192, 192, 12
    $region17: #{tpu_custom_call.1} parent=1 // pred_fallthru
      _
    // Predicated region
    $region18: #{tpu_custom_call.1} parent=1 // pred_check
      _
    $region19: #{tpu_custom_call.1} parent=1 // pred_check_branch
      %69 = sbr.rel (0) target = $region21
    $region20: #{tpu_custom_call.1} parent=1 // pred_region
      %s71 = ssub.s32 1024, 1024
      %72 = vsyncadd [#allocation9], %s71
      %s73 = sshll.u32 [#allocation10], 4
      %s74 = int_to_ptr.vmem [resolvable:$true] %s73
      %79 = dma.hbm_to_vmem [thread:$0]  %s4, 1024, %s74, [#allocation9], 64, 64, 4
    $region21: #{tpu_custom_call.1} parent=1 // pred_fallthru
      _
    // Predicated region
    $region22: #{tpu_custom_call.1} parent=1 // pred_check
      _
    $region23: #{tpu_custom_call.1} parent=1 // pred_check_branch
      %81 = sbr.rel (0) target = $region25
    $region24: #{tpu_custom_call.1} parent=1 // pred_region
      %s83 = ssub.s32 2048, 2048
      %84 = vsyncadd [#allocation12], %s83
      %s85 = sshll.u32 [#allocation11], 4
      %s86 = int_to_ptr.vmem [resolvable:$true] %s85
      %91 = dma.hbm_to_vmem [thread:$0]  %s5, 2048, %s86, [#allocation12], 64, 64, 4
    $region25: #{tpu_custom_call.1} parent=1 // pred_fallthru
      _
    // Predicated region
    $region26: #{tpu_custom_call.1} parent=1 // pred_check
      _
    $region27: #{tpu_custom_call.1} parent=1 // pred_check_branch
      %93 = sbr.rel (0) target = $region29
    $region28: #{tpu_custom_call.1} parent=1 // pred_region
      %s95 = ssub.s32 16, 16
      %96 = vsyncadd [#allocation12], %s95
      %s98 = sshll.u32 [#allocation13], 4
      %s99 = int_to_ptr.vmem [resolvable:$true] %s98
      %101 = dma.hbm_to_vmem [thread:$0]  %s6, 16, %s99, [#allocation12]
    $region29: #{tpu_custom_call.1} parent=1 // pred_fallthru
      _
    // Predicated region
    $region30: #{tpu_custom_call.1} parent=1 // pred_check
      _
    $region31: #{tpu_custom_call.1} parent=1 // pred_check_branch
      %103 = sbr.rel (0) target = $region33
    $region32: #{tpu_custom_call.1} parent=1 // pred_region
      %s105 = ssub.s32 1024, 1024
      %106 = vsyncadd [#allocation15], %s105
      %s107 = sshll.u32 [#allocation14], 4
      %s108 = int_to_ptr.vmem [resolvable:$true] %s107
      %113 = dma.hbm_to_vmem [thread:$0]  %s7, 1024, %s108, [#allocation15], 64, 64, 4
    $region33: #{tpu_custom_call.1} parent=1 // pred_fallthru
      _
    // Predicated region
    $region34: #{tpu_custom_call.1} parent=1 // pred_check
      _
    $region35: #{tpu_custom_call.1} parent=1 // pred_check_branch
      %115 = sbr.rel (0) target = $region37
    $region36: #{tpu_custom_call.1} parent=1 // pred_region
      %s117 = ssub.s32 16, 16
      %118 = vsyncadd [#allocation15], %s117
      %s120 = sshll.u32 [#allocation16], 4
      %s121 = int_to_ptr.vmem [resolvable:$true] %s120
      %123 = dma.hbm_to_vmem [thread:$0]  %s8, 16, %s121, [#allocation15]
    $region37: #{tpu_custom_call.1} parent=1 // pred_fallthru
      _
    // Predicated region
    $region38: #{tpu_custom_call.1} parent=1 // pred_check
      _
    $region39: #{tpu_custom_call.1} parent=1 // pred_check_branch
      %125 = sbr.rel (0) target = $region41
    $region40: #{tpu_custom_call.1} parent=1 // pred_region
      %126 = dma.done [#allocation3], 128
    $region41: #{tpu_custom_call.1} parent=1 // pred_fallthru
      _
    // Predicated region
    $region42: #{tpu_custom_call.1} parent=1 // pred_check
      _
    $region43: #{tpu_custom_call.1} parent=1 // pred_check_branch
      %128 = sbr.rel (0) target = $region45
    $region44: #{tpu_custom_call.1} parent=1 // pred_region
      %129 = dma.done [#allocation6], 128
    $region45: #{tpu_custom_call.1} parent=1 // pred_fallthru
      _
    // Predicated region
    $region46: #{tpu_custom_call.1} parent=1 // pred_check
      _
    $region47: #{tpu_custom_call.1} parent=1 // pred_check_branch
      %131 = sbr.rel (0) target = $region49
    $region48: #{tpu_custom_call.1} parent=1 // pred_region
      %132 = dma.done [#allocation6], 3072
    $region49: #{tpu_custom_call.1} parent=1 // pred_fallthru
      _
    // Predicated region
    $region50: #{tpu_custom_call.1} parent=1 // pred_check
      _
    $region51: #{tpu_custom_call.1} parent=1 // pred_check_branch
      %134 = sbr.rel (0) target = $region53
    $region52: #{tpu_custom_call.1} parent=1 // pred_region
      %135 = dma.done [#allocation9], 1536
    $region53: #{tpu_custom_call.1} parent=1 // pred_fallthru
      _
    // Predicated region
    $region54: #{tpu_custom_call.1} parent=1 // pred_check
      _
    $region55: #{tpu_custom_call.1} parent=1 // pred_check_branch
      %137 = sbr.rel (0) target = $region57
    $region56: #{tpu_custom_call.1} parent=1 // pred_region
      %138 = dma.done [#allocation9], 1024
    $region57: #{tpu_custom_call.1} parent=1 // pred_fallthru
      _
    // Predicated region
    $region58: #{tpu_custom_call.1} parent=1 // pred_check
      _
    $region59: #{tpu_custom_call.1} parent=1 // pred_check_branch
      %140 = sbr.rel (0) target = $region61
    $region60: #{tpu_custom_call.1} parent=1 // pred_region
      %141 = dma.done [#allocation12], 2048
    $region61: #{tpu_custom_call.1} parent=1 // pred_fallthru
      _
    // Predicated region
    $region62: #{tpu_custom_call.1} parent=1 // pred_check
      _
    $region63: #{tpu_custom_call.1} parent=1 // pred_check_branch
      %143 = sbr.rel (0) target = $region65
    $region64: #{tpu_custom_call.1} parent=1 // pred_region
      %144 = dma.done [#allocation12], 16
    $region65: #{tpu_custom_call.1} parent=1 // pred_fallthru
      _
    // Predicated region
    $region66: #{tpu_custom_call.1} parent=1 // pred_check
      _
    $region67: #{tpu_custom_call.1} parent=1 // pred_check_branch
      %146 = sbr.rel (0) target = $region69
    $region68: #{tpu_custom_call.1} parent=1 // pred_region
      %147 = dma.done [#allocation15], 1024
    $region69: #{tpu_custom_call.1} parent=1 // pred_fallthru
      _
    // Predicated region
    $region70: #{tpu_custom_call.1} parent=1 // pred_check
      _
    $region71: #{tpu_custom_call.1} parent=1 // pred_check_branch
      %149 = sbr.rel (0) target = $region73
    $region72: #{tpu_custom_call.1} parent=1 // pred_region
      %150 = dma.done [#allocation15], 16
    $region73: #{tpu_custom_call.1} parent=1 // pred_fallthru
      _
    %v152 = vld [vmem:[#allocation2] sm:$0xf]
    %v153 = vld [vmem:[#allocation2 + $0x4] sm:$0xf]
    %v154 = vld [vmem:[#allocation5] sm:$0xf]
    %v155 = vld [vmem:[#allocation5 + $0x4] sm:$0xf]
    %v156 = vld [vmem:[#allocation7] sm:$0xff]
    %v157 = vld [vmem:[#allocation7 + $0x8] sm:$0xf]
    %v158 = vld [vmem:[#allocation7 + $0xc] sm:$0xff]
    %v159 = vld [vmem:[#allocation7 + $0x14] sm:$0xf]
    %v160 = vld [vmem:[#allocation7 + $0x18] sm:$0xff]
    %v161 = vld [vmem:[#allocation7 + $0x20] sm:$0xf]
    %v162 = vld [vmem:[#allocation7 + $0x24] sm:$0xff]
    %v163 = vld [vmem:[#allocation7 + $0x2c] sm:$0xf]
    %v164 = vld [vmem:[#allocation7 + $0x30] sm:$0xff]
    %v165 = vld [vmem:[#allocation7 + $0x38] sm:$0xf]
    %v166 = vld [vmem:[#allocation7 + $0x3c] sm:$0xff]
    %v167 = vld [vmem:[#allocation7 + $0x44] sm:$0xf]
    %v168 = vld [vmem:[#allocation7 + $0x48] sm:$0xff]
    %v169 = vld [vmem:[#allocation7 + $0x50] sm:$0xf]
    %v170 = vld [vmem:[#allocation7 + $0x54] sm:$0xff]
    %v171 = vld [vmem:[#allocation7 + $0x5c] sm:$0xf]
    %v172 = vld [vmem:[#allocation7 + $0x60] sm:$0xff]
    %v173 = vld [vmem:[#allocation7 + $0x68] sm:$0xf]
    %v174 = vld [vmem:[#allocation7 + $0x6c] sm:$0xff]
    %v175 = vld [vmem:[#allocation7 + $0x74] sm:$0xf]
    %v176 = vld [vmem:[#allocation7 + $0x78] sm:$0xff]
    %v177 = vld [vmem:[#allocation7 + $0x80] sm:$0xf]
    %v178 = vld [vmem:[#allocation7 + $0x84] sm:$0xff]
    %v179 = vld [vmem:[#allocation7 + $0x8c] sm:$0xf]
    %v180 = vld [vmem:[#allocation7 + $0x90] sm:$0xff]
    %v181 = vld [vmem:[#allocation7 + $0x98] sm:$0xf]
    %v182 = vld [vmem:[#allocation7 + $0x9c] sm:$0xff]
    %v183 = vld [vmem:[#allocation7 + $0xa4] sm:$0xf]
    %v184 = vld [vmem:[#allocation7 + $0xa8] sm:$0xff]
    %v185 = vld [vmem:[#allocation7 + $0xb0] sm:$0xf]
    %v186 = vld [vmem:[#allocation7 + $0xb4] sm:$0xff]
    %v187 = vld [vmem:[#allocation7 + $0xbc] sm:$0xf]
    %v190 = vunpack.c.l.b16 %v152
    %v191 = vunpack.c.l.b16 %v153
    %v192 = vpack.c.b16 %v191, %v190
    %v226 = vunpack.c.l.b16 %v156
    %v227 = vunpack.c.h.b16 %v156
    %v228 = vunpack.c.l.b16 %v157
    %v229 = vunpack.c.l.b16 %v158
    %v230 = vunpack.c.h.b16 %v158
    %v231 = vunpack.c.l.b16 %v159
    %v232 = vunpack.c.l.b16 %v160
    %v233 = vunpack.c.h.b16 %v160
    %v234 = vunpack.c.l.b16 %v161
    %v235 = vunpack.c.l.b16 %v162
    %v236 = vunpack.c.h.b16 %v162
    %v237 = vunpack.c.l.b16 %v163
    %v238 = vunpack.c.l.b16 %v164
    %v239 = vunpack.c.h.b16 %v164
    %v240 = vunpack.c.l.b16 %v165
    %v241 = vunpack.c.l.b16 %v166
    %v242 = vunpack.c.h.b16 %v166
    %v243 = vunpack.c.l.b16 %v167
    %v244 = vunpack.c.l.b16 %v168
    %v245 = vunpack.c.h.b16 %v168
    %v246 = vunpack.c.l.b16 %v169
    %v247 = vunpack.c.l.b16 %v170
    %v248 = vunpack.c.h.b16 %v170
    %v249 = vunpack.c.l.b16 %v171
    %v250 = vunpack.c.l.b16 %v172
    %v251 = vunpack.c.h.b16 %v172
    %v252 = vunpack.c.l.b16 %v173
    %v253 = vunpack.c.l.b16 %v174
    %v254 = vunpack.c.h.b16 %v174
    %v255 = vunpack.c.l.b16 %v175
    %v256 = vunpack.c.l.b16 %v176
    %v257 = vunpack.c.h.b16 %v176
    %v258 = vunpack.c.l.b16 %v177
    %v259 = vunpack.c.l.b16 %v178
    %v260 = vunpack.c.h.b16 %v178
    %v261 = vunpack.c.l.b16 %v179
    %v262 = vunpack.c.l.b16 %v180
    %v263 = vunpack.c.h.b16 %v180
    %v264 = vunpack.c.l.b16 %v181
    %v265 = vunpack.c.l.b16 %v182
    %v266 = vunpack.c.h.b16 %v182
    %v267 = vunpack.c.l.b16 %v183
    %v268 = vunpack.c.l.b16 %v184
    %v269 = vunpack.c.h.b16 %v184
    %v270 = vunpack.c.l.b16 %v185
    %v271 = vunpack.c.l.b16 %v186
    %v272 = vunpack.c.h.b16 %v186
    %v273 = vunpack.c.l.b16 %v187
    %v274 = vpack.c.b16 %v229, %v226
    %v275 = vpack.c.b16 %v230, %v227
    %v276 = vpack.c.b16 %v231, %v228
    %v277 = vpack.c.b16 %v235, %v232
    %v278 = vpack.c.b16 %v236, %v233
    %v279 = vpack.c.b16 %v237, %v234
    %v280 = vpack.c.b16 %v241, %v238
    %v281 = vpack.c.b16 %v242, %v239
    %v282 = vpack.c.b16 %v243, %v240
    %v283 = vpack.c.b16 %v247, %v244
    %v284 = vpack.c.b16 %v248, %v245
    %v285 = vpack.c.b16 %v249, %v246
    %v286 = vpack.c.b16 %v253, %v250
    %v287 = vpack.c.b16 %v254, %v251
    %v288 = vpack.c.b16 %v255, %v252
    %v289 = vpack.c.b16 %v259, %v256
    %v290 = vpack.c.b16 %v260, %v257
    %v291 = vpack.c.b16 %v261, %v258
    %v292 = vpack.c.b16 %v265, %v262
    %v293 = vpack.c.b16 %v266, %v263
    %v294 = vpack.c.b16 %v267, %v264
    %v295 = vpack.c.b16 %v271, %v268
    %v296 = vpack.c.b16 %v272, %v269
    %v297 = vpack.c.b16 %v273, %v270
    %322 = vmatprep.subr.bf16.mxu0 %v275
    %323 = vmatpush1.bf16.msra.mxu0 %v274
    %324 = vmatprep.subr.bf16.mxu0 %v278
    %325 = vmatpush1.bf16.msra.mxu0 %v277
    %326 = vmatprep.subr.bf16.mxu0 %v281
    %327 = vmatpush1.bf16.msra.mxu0 %v280
    %328 = vmatprep.subr.bf16.mxu0 %v284
    %329 = vmatpush1.bf16.msra.mxu0 %v283
    %330 = vmatprep.subr.bf16.mxu0 %v287
    %331 = vmatpush1.bf16.msra.mxu0 %v286
    %332 = vmatprep.subr.bf16.mxu0 %v290
    %333 = vmatpush1.bf16.msra.mxu0 %v289
    %334 = vmatprep.subr.bf16.mxu0 %v293
    %335 = vmatpush1.bf16.msra.mxu0 %v292
    %336 = vmatprep.subr.bf16.mxu0 %v296
    %337 = vmatpush1.bf16.msra.mxu0 %v295
    %338 = vmatprep.subr.bf16.mxu0 0
    %339 = vmatpush1.bf16.msra.mxu0 0
    %340 = vmatprep.subr.bf16.mxu0 0
    %341 = vmatpush1.bf16.msra.mxu0 0
    %342 = vmatprep.subr.bf16.mxu0 0
    %343 = vmatpush1.bf16.msra.mxu0 0
    %344 = vmatprep.subr.bf16.mxu0 0
    %345 = vmatpush1.bf16.msra.mxu0 0
    %346 = vmatprep.subr.bf16.mxu0 0
    %347 = vmatpush1.bf16.msra.mxu0 0
    %348 = vmatprep.subr.bf16.mxu0 0
    %349 = vmatpush1.bf16.msra.mxu0 0
    %350 = vmatprep.subr.bf16.mxu0 0
    %351 = vmatpush1.bf16.msra.mxu0 0
    %352 = vmatprep.subr.bf16.mxu0 0
    %353 = vmatpush1.bf16.msra.mxu0 0
    %354 = vmatprep.mubr.bf16.mxu0 0
    %355 = vmatmul.mubr.bf16.gmra.mrb[0].mxu0 %v192
    %v356 = vpop.f32.mrb[0].mxu0
    %v357 = vadd.f32 0.0, %v356
    %v358 = vpop.f32.mrb[0].mxu0
    %v359 = vadd.f32 0.0, %v358
    %v360 = vpop.f32.mrb[0].mxu0
    %v361 = vadd.f32 0.0, %v360
    %v362 = vpop.f32.mrb[0].mxu0
    %v363 = vadd.f32 0.0, %v362
    %364 = vdwg.mxu0
    %365 = vmatprep.subr.bf16.mxu0 0
    %366 = vmatpush1.bf16.msra.mxu0 %v276
    %367 = vmatprep.subr.bf16.mxu0 0
    %368 = vmatpush1.bf16.msra.mxu0 %v279
    %369 = vmatprep.subr.bf16.mxu0 0
    %370 = vmatpush1.bf16.msra.mxu0 %v282
    %371 = vmatprep.subr.bf16.mxu0 0
    %372 = vmatpush1.bf16.msra.mxu0 %v285
    %373 = vmatprep.subr.bf16.mxu0 0
    %374 = vmatpush1.bf16.msra.mxu0 %v288
    %375 = vmatprep.subr.bf16.mxu0 0
    %376 = vmatpush1.bf16.msra.mxu0 %v291
    %377 = vmatprep.subr.bf16.mxu0 0
    %378 = vmatpush1.bf16.msra.mxu0 %v294
    %379 = vmatprep.subr.bf16.mxu0 0
    %380 = vmatpush1.bf16.msra.mxu0 %v297
    %381 = vmatprep.subr.bf16.mxu0 0
    %382 = vmatpush1.bf16.msra.mxu0 0
    %383 = vmatprep.subr.bf16.mxu0 0
    %384 = vmatpush1.bf16.msra.mxu0 0
    %385 = vmatprep.subr.bf16.mxu0 0
    %386 = vmatpush1.bf16.msra.mxu0 0
    %387 = vmatprep.subr.bf16.mxu0 0
    %388 = vmatpush1.bf16.msra.mxu0 0
    %389 = vmatprep.subr.bf16.mxu0 0
    %390 = vmatpush1.bf16.msra.mxu0 0
    %391 = vmatprep.subr.bf16.mxu0 0
    %392 = vmatpush1.bf16.msra.mxu0 0
    %393 = vmatprep.subr.bf16.mxu0 0
    %394 = vmatpush1.bf16.msra.mxu0 0
    %395 = vmatprep.subr.bf16.mxu0 0
    %396 = vmatpush1.bf16.msra.mxu0 0
    %397 = vmatprep.mubr.bf16.mxu0 0
    %398 = vmatmul.mubr.bf16.gmra.mrb[0].mxu0 %v192
    %v399 = vpop.f32.mrb[0].mxu0
    %v400 = vadd.f32 0.0, %v399
    %v401 = vpop.f32.mrb[0].mxu0
    %v402 = vpop.f32.mrb[0].mxu0
    %v403 = vadd.f32 0.0, %v402
    %v404 = vpop.f32.mrb[0].mxu0
    %405 = vdwg.mxu0
    %v406 = vld [vmem:[#allocation8] sm:$0xff]
    %v407 = vld [vmem:[#allocation8 + $0x8] sm:$0xf]
    %v408 = vld [vmem:[#allocation8 + $0xc] sm:$0xff]
    %v409 = vld [vmem:[#allocation8 + $0x14] sm:$0xf]
    %v410 = vld [vmem:[#allocation8 + $0x18] sm:$0xff]
    %v411 = vld [vmem:[#allocation8 + $0x20] sm:$0xf]
    %v412 = vld [vmem:[#allocation8 + $0x24] sm:$0xff]
    %v413 = vld [vmem:[#allocation8 + $0x2c] sm:$0xf]
    %v414 = vld [vmem:[#allocation8 + $0x30] sm:$0xff]
    %v415 = vld [vmem:[#allocation8 + $0x38] sm:$0xf]
    %v416 = vld [vmem:[#allocation8 + $0x3c] sm:$0xff]
    %v417 = vld [vmem:[#allocation8 + $0x44] sm:$0xf]
    %v418 = vld [vmem:[#allocation8 + $0x48] sm:$0xff]
    %v419 = vld [vmem:[#allocation8 + $0x50] sm:$0xf]
    %v420 = vld [vmem:[#allocation8 + $0x54] sm:$0xff]
    %v421 = vld [vmem:[#allocation8 + $0x5c] sm:$0xf]
    %v424 = vunpack.c.l.b16 %v154
    %v425 = vunpack.c.l.b16 %v155
    %v426 = vpack.c.b16 %v425, %v424
    %v443 = vunpack.c.l.b16 %v406
    %v444 = vunpack.c.h.b16 %v406
    %v445 = vunpack.c.l.b16 %v407
    %v446 = vunpack.c.l.b16 %v408
    %v447 = vunpack.c.h.b16 %v408
    %v448 = vunpack.c.l.b16 %v409
    %v449 = vunpack.c.l.b16 %v410
    %v450 = vunpack.c.h.b16 %v410
    %v451 = vunpack.c.l.b16 %v411
    %v452 = vunpack.c.l.b16 %v412
    %v453 = vunpack.c.h.b16 %v412
    %v454 = vunpack.c.l.b16 %v413
    %v455 = vunpack.c.l.b16 %v414
    %v456 = vunpack.c.h.b16 %v414
    %v457 = vunpack.c.l.b16 %v415
    %v458 = vunpack.c.l.b16 %v416
    %v459 = vunpack.c.h.b16 %v416
    %v460 = vunpack.c.l.b16 %v417
    %v461 = vunpack.c.l.b16 %v418
    %v462 = vunpack.c.h.b16 %v418
    %v463 = vunpack.c.l.b16 %v419
    %v464 = vunpack.c.l.b16 %v420
    %v465 = vunpack.c.h.b16 %v420
    %v466 = vunpack.c.l.b16 %v421
    %v467 = vpack.c.b16 %v446, %v443
    %v468 = vpack.c.b16 %v447, %v444
    %v469 = vpack.c.b16 %v448, %v445
    %v470 = vpack.c.b16 %v452, %v449
    %v471 = vpack.c.b16 %v453, %v450
    %v472 = vpack.c.b16 %v454, %v451
    %v473 = vpack.c.b16 %v458, %v455
    %v474 = vpack.c.b16 %v459, %v456
    %v475 = vpack.c.b16 %v460, %v457
    %v476 = vpack.c.b16 %v464, %v461
    %v477 = vpack.c.b16 %v465, %v462
    %v478 = vpack.c.b16 %v466, %v463
    %vm491 = vcmask 523264
    %v493 = vsel %vm491, %v426, 0
    %495 = vmatprep.subr.bf16.mxu0 %v468
    %496 = vmatpush1.bf16.msra.mxu0 %v467
    %497 = vmatprep.subr.bf16.mxu0 %v471
    %498 = vmatpush1.bf16.msra.mxu0 %v470
    %499 = vmatprep.subr.bf16.mxu0 %v474
    %500 = vmatpush1.bf16.msra.mxu0 %v473
    %501 = vmatprep.subr.bf16.mxu0 %v477
    %502 = vmatpush1.bf16.msra.mxu0 %v476
    %503 = vmatprep.subr.bf16.mxu0 0
    %504 = vmatpush1.bf16.msra.mxu0 0
    %505 = vmatprep.subr.bf16.mxu0 0
    %506 = vmatpush1.bf16.msra.mxu0 0
    %507 = vmatprep.subr.bf16.mxu0 0
    %508 = vmatpush1.bf16.msra.mxu0 0
    %509 = vmatprep.subr.bf16.mxu0 0
    %510 = vmatpush1.bf16.msra.mxu0 0
    %511 = vmatprep.subr.bf16.mxu0 0
    %512 = vmatpush1.bf16.msra.mxu0 0
    %513 = vmatprep.subr.bf16.mxu0 0
    %514 = vmatpush1.bf16.msra.mxu0 0
    %515 = vmatprep.subr.bf16.mxu0 0
    %516 = vmatpush1.bf16.msra.mxu0 0
    %517 = vmatprep.subr.bf16.mxu0 0
    %518 = vmatpush1.bf16.msra.mxu0 0
    %519 = vmatprep.subr.bf16.mxu0 0
    %520 = vmatpush1.bf16.msra.mxu0 0
    %521 = vmatprep.subr.bf16.mxu0 0
    %522 = vmatpush1.bf16.msra.mxu0 0
    %523 = vmatprep.subr.bf16.mxu0 0
    %524 = vmatpush1.bf16.msra.mxu0 0
    %525 = vmatprep.subr.bf16.mxu0 0
    %526 = vmatpush1.bf16.msra.mxu0 0
    %527 = vmatprep.mubr.bf16.mxu0 0
    %528 = vmatmul.mubr.bf16.gmra.mrb[0].mxu0 %v493
    %v529 = vpop.f32.mrb[0].mxu0
    %v530 = vadd.f32 0.0, %v529
    %v531 = vpop.f32.mrb[0].mxu0
    %v532 = vadd.f32 0.0, %v531
    %v533 = vpop.f32.mrb[0].mxu0
    %v534 = vadd.f32 0.0, %v533
    %v535 = vpop.f32.mrb[0].mxu0
    %v536 = vadd.f32 0.0, %v535
    %537 = vdwg.mxu0
    %538 = vmatprep.subr.bf16.mxu0 0
    %539 = vmatpush1.bf16.msra.mxu0 %v469
    %540 = vmatprep.subr.bf16.mxu0 0
    %541 = vmatpush1.bf16.msra.mxu0 %v472
    %542 = vmatprep.subr.bf16.mxu0 0
    %543 = vmatpush1.bf16.msra.mxu0 %v475
    %544 = vmatprep.subr.bf16.mxu0 0
    %545 = vmatpush1.bf16.msra.mxu0 %v478
    %546 = vmatprep.subr.bf16.mxu0 0
    %547 = vmatpush1.bf16.msra.mxu0 0
    %548 = vmatprep.subr.bf16.mxu0 0
    %549 = vmatpush1.bf16.msra.mxu0 0
    %550 = vmatprep.subr.bf16.mxu0 0
    %551 = vmatpush1.bf16.msra.mxu0 0
    %552 = vmatprep.subr.bf16.mxu0 0
    %553 = vmatpush1.bf16.msra.mxu0 0
    %554 = vmatprep.subr.bf16.mxu0 0
    %555 = vmatpush1.bf16.msra.mxu0 0
    %556 = vmatprep.subr.bf16.mxu0 0
    %557 = vmatpush1.bf16.msra.mxu0 0
    %558 = vmatprep.subr.bf16.mxu0 0
    %559 = vmatpush1.bf16.msra.mxu0 0
    %560 = vmatprep.subr.bf16.mxu0 0
    %561 = vmatpush1.bf16.msra.mxu0 0
    %562 = vmatprep.subr.bf16.mxu0 0
    %563 = vmatpush1.bf16.msra.mxu0 0
    %564 = vmatprep.subr.bf16.mxu0 0
    %565 = vmatpush1.bf16.msra.mxu0 0
    %566 = vmatprep.subr.bf16.mxu0 0
    %567 = vmatpush1.bf16.msra.mxu0 0
    %568 = vmatprep.subr.bf16.mxu0 0
    %569 = vmatpush1.bf16.msra.mxu0 0
    %570 = vmatprep.mubr.bf16.mxu0 0
    %571 = vmatmul.mubr.bf16.gmra.mrb[0].mxu0 %v493
    %v572 = vpop.f32.mrb[0].mxu0
    %v573 = vadd.f32 0.0, %v572
    %v574 = vpop.f32.mrb[0].mxu0
    %v575 = vpop.f32.mrb[0].mxu0
    %v576 = vadd.f32 0.0, %v575
    %v577 = vpop.f32.mrb[0].mxu0
    %578 = vdwg.mxu0
    %v579 = vsub.f32 %v400, %v573
    %v580 = vsub.f32 %v403, %v576
    %v581 = vld [vmem:[#allocation10] sm:$0xf]
    %v582 = vld [vmem:[#allocation10 + $0x4] sm:$0xf]
    %v583 = vld [vmem:[#allocation10 + $0x8] sm:$0xf]
    %v584 = vld [vmem:[#allocation10 + $0xc] sm:$0xf]
    %v585 = vld [vmem:[#allocation10 + $0x10] sm:$0xf]
    %v586 = vld [vmem:[#allocation10 + $0x14] sm:$0xf]
    %v587 = vld [vmem:[#allocation10 + $0x18] sm:$0xf]
    %v588 = vld [vmem:[#allocation10 + $0x1c] sm:$0xf]
    %v589 = vld [vmem:[#allocation10 + $0x20] sm:$0xf]
    %v590 = vld [vmem:[#allocation10 + $0x24] sm:$0xf]
    %v591 = vld [vmem:[#allocation10 + $0x28] sm:$0xf]
    %v592 = vld [vmem:[#allocation10 + $0x2c] sm:$0xf]
    %v593 = vld [vmem:[#allocation10 + $0x30] sm:$0xf]
    %v594 = vld [vmem:[#allocation10 + $0x34] sm:$0xf]
    %v595 = vld [vmem:[#allocation10 + $0x38] sm:$0xf]
    %v596 = vld [vmem:[#allocation10 + $0x3c] sm:$0xf]
    %v597 = vmul.f32 %v357, %v579
    %v598 = vmul.f32 %v361, %v580
    %v599 = vpack.c.bf16 %v598, %v597
    %v616 = vunpack.c.l.b16 %v581
    %v617 = vunpack.c.l.b16 %v582
    %v618 = vunpack.c.l.b16 %v583
    %v619 = vunpack.c.l.b16 %v584
    %v620 = vunpack.c.l.b16 %v585
    %v621 = vunpack.c.l.b16 %v586
    %v622 = vunpack.c.l.b16 %v587
    %v623 = vunpack.c.l.b16 %v588
    %v624 = vunpack.c.l.b16 %v589
    %v625 = vunpack.c.l.b16 %v590
    %v626 = vunpack.c.l.b16 %v591
    %v627 = vunpack.c.l.b16 %v592
    %v628 = vunpack.c.l.b16 %v593
    %v629 = vunpack.c.l.b16 %v594
    %v630 = vunpack.c.l.b16 %v595
    %v631 = vunpack.c.l.b16 %v596
    %v632 = vpack.c.b16 %v617, %v616
    %v633 = vpack.c.b16 %v619, %v618
    %v634 = vpack.c.b16 %v621, %v620
    %v635 = vpack.c.b16 %v623, %v622
    %v636 = vpack.c.b16 %v625, %v624
    %v637 = vpack.c.b16 %v627, %v626
    %v638 = vpack.c.b16 %v629, %v628
    %v639 = vpack.c.b16 %v631, %v630
    %648 = vmatprep.subr.bf16.mxu0 0
    %649 = vmatpush1.bf16.msra.mxu0 %v632
    %650 = vmatprep.subr.bf16.mxu0 0
    %651 = vmatpush1.bf16.msra.mxu0 %v633
    %652 = vmatprep.subr.bf16.mxu0 0
    %653 = vmatpush1.bf16.msra.mxu0 %v634
    %654 = vmatprep.subr.bf16.mxu0 0
    %655 = vmatpush1.bf16.msra.mxu0 %v635
    %656 = vmatprep.subr.bf16.mxu0 0
    %657 = vmatpush1.bf16.msra.mxu0 %v636
    %658 = vmatprep.subr.bf16.mxu0 0
    %659 = vmatpush1.bf16.msra.mxu0 %v637
    %660 = vmatprep.subr.bf16.mxu0 0
    %661 = vmatpush1.bf16.msra.mxu0 %v638
    %662 = vmatprep.subr.bf16.mxu0 0
    %663 = vmatpush1.bf16.msra.mxu0 %v639
    %664 = vmatprep.subr.bf16.mxu0 0
    %665 = vmatpush1.bf16.msra.mxu0 0
    %666 = vmatprep.subr.bf16.mxu0 0
    %667 = vmatpush1.bf16.msra.mxu0 0
    %668 = vmatprep.subr.bf16.mxu0 0
    %669 = vmatpush1.bf16.msra.mxu0 0
    %670 = vmatprep.subr.bf16.mxu0 0
    %671 = vmatpush1.bf16.msra.mxu0 0
    %672 = vmatprep.subr.bf16.mxu0 0
    %673 = vmatpush1.bf16.msra.mxu0 0
    %674 = vmatprep.subr.bf16.mxu0 0
    %675 = vmatpush1.bf16.msra.mxu0 0
    %676 = vmatprep.subr.bf16.mxu0 0
    %677 = vmatpush1.bf16.msra.mxu0 0
    %678 = vmatprep.subr.bf16.mxu0 0
    %679 = vmatpush1.bf16.msra.mxu0 0
    %680 = vmatprep.mubr.bf16.mxu0 0
    %681 = vmatmul.mubr.bf16.gmra.mrb[0].mxu0 %v599
    %v682 = vpop.f32.mrb[0].mxu0
    %v683 = vadd.f32 0.0, %v682
    %v684 = vpop.f32.mrb[0].mxu0
    %v685 = vpop.f32.mrb[0].mxu0
    %v686 = vadd.f32 0.0, %v685
    %v687 = vpop.f32.mrb[0].mxu0
    %688 = vdwg.mxu0
    %v689 = vxor.u32 %v683, 2147483648
    %v690 = vxor.u32 %v686, 2147483648
    %v691 = vmul.f32 %v689, 1.442695
    %v692 = vpow.pop %v691
    %v693 = vmul.f32 %v690, 1.442695
    %v694 = vpow.pop %v693
    %v695 = vadd.f32 %v692, 1.0
    %v696 = vadd.f32 %v694, 1.0
    %v697 = vrcp.pop %v695
    %v698 = vmul.f32 1.0, %v697
    %v699 = vrcp.pop %v696
    %v700 = vmul.f32 1.0, %v699
    %v701 = vmul.f32 %v530, %v579
    %v702 = vmul.f32 %v534, %v580
    %v703 = vpack.c.bf16 %v702, %v701
    %704 = vmatprep.subr.bf16.mxu0 0
    %705 = vmatpush1.bf16.msra.mxu0 %v632
    %706 = vmatprep.subr.bf16.mxu0 0
    %707 = vmatpush1.bf16.msra.mxu0 %v633
    %708 = vmatprep.subr.bf16.mxu0 0
    %709 = vmatpush1.bf16.msra.mxu0 %v634
    %710 = vmatprep.subr.bf16.mxu0 0
    %711 = vmatpush1.bf16.msra.mxu0 %v635
    %712 = vmatprep.subr.bf16.mxu0 0
    %713 = vmatpush1.bf16.msra.mxu0 %v636
    %714 = vmatprep.subr.bf16.mxu0 0
    %715 = vmatpush1.bf16.msra.mxu0 %v637
    %716 = vmatprep.subr.bf16.mxu0 0
    %717 = vmatpush1.bf16.msra.mxu0 %v638
    %718 = vmatprep.subr.bf16.mxu0 0
    %719 = vmatpush1.bf16.msra.mxu0 %v639
    %720 = vmatprep.subr.bf16.mxu0 0
    %721 = vmatpush1.bf16.msra.mxu0 0
    %722 = vmatprep.subr.bf16.mxu0 0
    %723 = vmatpush1.bf16.msra.mxu0 0
    %724 = vmatprep.subr.bf16.mxu0 0
    %725 = vmatpush1.bf16.msra.mxu0 0
    %726 = vmatprep.subr.bf16.mxu0 0
    %727 = vmatpush1.bf16.msra.mxu0 0
    %728 = vmatprep.subr.bf16.mxu0 0
    %729 = vmatpush1.bf16.msra.mxu0 0
    %730 = vmatprep.subr.bf16.mxu0 0
    %731 = vmatpush1.bf16.msra.mxu0 0
    %732 = vmatprep.subr.bf16.mxu0 0
    %733 = vmatpush1.bf16.msra.mxu0 0
    %734 = vmatprep.subr.bf16.mxu0 0
    %735 = vmatpush1.bf16.msra.mxu0 0
    %736 = vmatprep.mubr.bf16.mxu0 0
    %737 = vmatmul.mubr.bf16.gmra.mrb[0].mxu0 %v703
    %v738 = vpop.f32.mrb[0].mxu0
    %v739 = vadd.f32 0.0, %v738
    %v740 = vpop.f32.mrb[0].mxu0
    %v741 = vpop.f32.mrb[0].mxu0
    %v742 = vadd.f32 0.0, %v741
    %v743 = vpop.f32.mrb[0].mxu0
    %744 = vdwg.mxu0
    %v745 = vxor.u32 %v739, 2147483648
    %v746 = vxor.u32 %v742, 2147483648
    %v747 = vmul.f32 %v745, 1.442695
    %v748 = vpow.pop %v747
    %v749 = vmul.f32 %v746, 1.442695
    %v750 = vpow.pop %v749
    %v751 = vadd.f32 %v748, 1.0
    %v752 = vadd.f32 %v750, 1.0
    %v753 = vrcp.pop %v751
    %v754 = vmul.f32 1.0, %v753
    %v755 = vrcp.pop %v752
    %v756 = vmul.f32 1.0, %v755
    %v757 = vsub.f32 %v359, %v532
    %v758 = vsub.f32 %v363, %v536
    %v759 = vmul.f32 %v757, %v698
    %v760 = vmul.f32 %v758, %v700
    %v761 = vadd.f32 %v759, %v532
    %v762 = vadd.f32 %v760, %v536
    %v763 = vmul.f32 %v757, %v754
    %v764 = vmul.f32 %v758, %v756
    %v765 = vadd.f32 %v763, %v532
    %v766 = vadd.f32 %v764, %v536
    %v767 = vld [vmem:[#allocation11] sm:$0xf]
    %v768 = vld [vmem:[#allocation11 + $0x4] sm:$0xf]
    %v769 = vld [vmem:[#allocation11 + $0x8] sm:$0xf]
    %v770 = vld [vmem:[#allocation11 + $0xc] sm:$0xf]
    %v771 = vld [vmem:[#allocation11 + $0x10] sm:$0xf]
    %v772 = vld [vmem:[#allocation11 + $0x14] sm:$0xf]
    %v773 = vld [vmem:[#allocation11 + $0x18] sm:$0xf]
    %v774 = vld [vmem:[#allocation11 + $0x1c] sm:$0xf]
    %v775 = vld [vmem:[#allocation11 + $0x20] sm:$0xf]
    %v776 = vld [vmem:[#allocation11 + $0x24] sm:$0xf]
    %v777 = vld [vmem:[#allocation11 + $0x28] sm:$0xf]
    %v778 = vld [vmem:[#allocation11 + $0x2c] sm:$0xf]
    %v779 = vld [vmem:[#allocation11 + $0x30] sm:$0xf]
    %v780 = vld [vmem:[#allocation11 + $0x34] sm:$0xf]
    %v781 = vld [vmem:[#allocation11 + $0x38] sm:$0xf]
    %v782 = vld [vmem:[#allocation11 + $0x3c] sm:$0xf]
    %v783 = vld [vmem:[#allocation11 + $0x40] sm:$0xf]
    %v784 = vld [vmem:[#allocation11 + $0x44] sm:$0xf]
    %v785 = vld [vmem:[#allocation11 + $0x48] sm:$0xf]
    %v786 = vld [vmem:[#allocation11 + $0x4c] sm:$0xf]
    %v787 = vld [vmem:[#allocation11 + $0x50] sm:$0xf]
    %v788 = vld [vmem:[#allocation11 + $0x54] sm:$0xf]
    %v789 = vld [vmem:[#allocation11 + $0x58] sm:$0xf]
    %v790 = vld [vmem:[#allocation11 + $0x5c] sm:$0xf]
    %v791 = vld [vmem:[#allocation11 + $0x60] sm:$0xf]
    %v792 = vld [vmem:[#allocation11 + $0x64] sm:$0xf]
    %v793 = vld [vmem:[#allocation11 + $0x68] sm:$0xf]
    %v794 = vld [vmem:[#allocation11 + $0x6c] sm:$0xf]
    %v795 = vld [vmem:[#allocation11 + $0x70] sm:$0xf]
    %v796 = vld [vmem:[#allocation11 + $0x74] sm:$0xf]
    %v797 = vld [vmem:[#allocation11 + $0x78] sm:$0xf]
    %v798 = vld [vmem:[#allocation11 + $0x7c] sm:$0xf]
    %v799 = vpack.c.bf16 %v762, %v761
    %v800 = vpack.c.bf16 %v766, %v765
    %v817 = vunpack.c.l.b16 %v783
    %v818 = vunpack.c.l.b16 %v784
    %v819 = vunpack.c.l.b16 %v785
    %v820 = vunpack.c.l.b16 %v786
    %v821 = vunpack.c.l.b16 %v787
    %v822 = vunpack.c.l.b16 %v788
    %v823 = vunpack.c.l.b16 %v789
    %v824 = vunpack.c.l.b16 %v790
    %v825 = vunpack.c.l.b16 %v791
    %v826 = vunpack.c.l.b16 %v792
    %v827 = vunpack.c.l.b16 %v793
    %v828 = vunpack.c.l.b16 %v794
    %v829 = vunpack.c.l.b16 %v795
    %v830 = vunpack.c.l.b16 %v796
    %v831 = vunpack.c.l.b16 %v797
    %v832 = vunpack.c.l.b16 %v798
    %v833 = vpack.c.b16 %v818, %v817
    %v834 = vpack.c.b16 %v820, %v819
    %v835 = vpack.c.b16 %v822, %v821
    %v836 = vpack.c.b16 %v824, %v823
    %v837 = vpack.c.b16 %v826, %v825
    %v838 = vpack.c.b16 %v828, %v827
    %v839 = vpack.c.b16 %v830, %v829
    %v840 = vpack.c.b16 %v832, %v831
    %849 = vmatprep.subr.bf16.mxu0 0
    %850 = vmatpush1.bf16.msra.mxu0 %v833
    %851 = vmatprep.subr.bf16.mxu0 0
    %852 = vmatpush1.bf16.msra.mxu0 %v834
    %853 = vmatprep.subr.bf16.mxu0 0
    %854 = vmatpush1.bf16.msra.mxu0 %v835
    %855 = vmatprep.subr.bf16.mxu0 0
    %856 = vmatpush1.bf16.msra.mxu0 %v836
    %857 = vmatprep.subr.bf16.mxu0 0
    %858 = vmatpush1.bf16.msra.mxu0 %v837
    %859 = vmatprep.subr.bf16.mxu0 0
    %860 = vmatpush1.bf16.msra.mxu0 %v838
    %861 = vmatprep.subr.bf16.mxu0 0
    %862 = vmatpush1.bf16.msra.mxu0 %v839
    %863 = vmatprep.subr.bf16.mxu0 0
    %864 = vmatpush1.bf16.msra.mxu0 %v840
    %865 = vmatprep.subr.bf16.mxu0 0
    %866 = vmatpush1.bf16.msra.mxu0 0
    %867 = vmatprep.subr.bf16.mxu0 0
    %868 = vmatpush1.bf16.msra.mxu0 0
    %869 = vmatprep.subr.bf16.mxu0 0
    %870 = vmatpush1.bf16.msra.mxu0 0
    %871 = vmatprep.subr.bf16.mxu0 0
    %872 = vmatpush1.bf16.msra.mxu0 0
    %873 = vmatprep.subr.bf16.mxu0 0
    %874 = vmatpush1.bf16.msra.mxu0 0
    %875 = vmatprep.subr.bf16.mxu0 0
    %876 = vmatpush1.bf16.msra.mxu0 0
    %877 = vmatprep.subr.bf16.mxu0 0
    %878 = vmatpush1.bf16.msra.mxu0 0
    %879 = vmatprep.subr.bf16.mxu0 0
    %880 = vmatpush1.bf16.msra.mxu0 0
    %881 = vmatprep.mubr.bf16.mxu0 0
    %882 = vmatmul.mubr.bf16.gmra.mrb[0].mxu0 %v800
    %v883 = vpop.f32.mrb[0].mxu0
    %v884 = vadd.f32 0.0, %v883
    %v885 = vpop.f32.mrb[0].mxu0
    %v886 = vpop.f32.mrb[0].mxu0
    %v887 = vadd.f32 0.0, %v886
    %v888 = vpop.f32.mrb[0].mxu0
    %889 = vdwg.mxu0
    %v906 = vunpack.c.l.b16 %v767
    %v907 = vunpack.c.l.b16 %v768
    %v908 = vunpack.c.l.b16 %v769
    %v909 = vunpack.c.l.b16 %v770
    %v910 = vunpack.c.l.b16 %v771
    %v911 = vunpack.c.l.b16 %v772
    %v912 = vunpack.c.l.b16 %v773
    %v913 = vunpack.c.l.b16 %v774
    %v914 = vunpack.c.l.b16 %v775
    %v915 = vunpack.c.l.b16 %v776
    %v916 = vunpack.c.l.b16 %v777
    %v917 = vunpack.c.l.b16 %v778
    %v918 = vunpack.c.l.b16 %v779
    %v919 = vunpack.c.l.b16 %v780
    %v920 = vunpack.c.l.b16 %v781
    %v921 = vunpack.c.l.b16 %v782
    %v922 = vpack.c.b16 %v907, %v906
    %v923 = vpack.c.b16 %v909, %v908
    %v924 = vpack.c.b16 %v911, %v910
    %v925 = vpack.c.b16 %v913, %v912
    %v926 = vpack.c.b16 %v915, %v914
    %v927 = vpack.c.b16 %v917, %v916
    %v928 = vpack.c.b16 %v919, %v918
    %v929 = vpack.c.b16 %v921, %v920
    %938 = vmatprep.subr.bf16.mxu0 0
    %939 = vmatpush1.bf16.msra.mxu0 %v922
    %940 = vmatprep.subr.bf16.mxu0 0
    %941 = vmatpush1.bf16.msra.mxu0 %v923
    %942 = vmatprep.subr.bf16.mxu0 0
    %943 = vmatpush1.bf16.msra.mxu0 %v924
    %944 = vmatprep.subr.bf16.mxu0 0
    %945 = vmatpush1.bf16.msra.mxu0 %v925
    %946 = vmatprep.subr.bf16.mxu0 0
    %947 = vmatpush1.bf16.msra.mxu0 %v926
    %948 = vmatprep.subr.bf16.mxu0 0
    %949 = vmatpush1.bf16.msra.mxu0 %v927
    %950 = vmatprep.subr.bf16.mxu0 0
    %951 = vmatpush1.bf16.msra.mxu0 %v928
    %952 = vmatprep.subr.bf16.mxu0 0
    %953 = vmatpush1.bf16.msra.mxu0 %v929
    %954 = vmatprep.subr.bf16.mxu0 0
    %955 = vmatpush1.bf16.msra.mxu0 0
    %956 = vmatprep.subr.bf16.mxu0 0
    %957 = vmatpush1.bf16.msra.mxu0 0
    %958 = vmatprep.subr.bf16.mxu0 0
    %959 = vmatpush1.bf16.msra.mxu0 0
    %960 = vmatprep.subr.bf16.mxu0 0
    %961 = vmatpush1.bf16.msra.mxu0 0
    %962 = vmatprep.subr.bf16.mxu0 0
    %963 = vmatpush1.bf16.msra.mxu0 0
    %964 = vmatprep.subr.bf16.mxu0 0
    %965 = vmatpush1.bf16.msra.mxu0 0
    %966 = vmatprep.subr.bf16.mxu0 0
    %967 = vmatpush1.bf16.msra.mxu0 0
    %968 = vmatprep.subr.bf16.mxu0 0
    %969 = vmatpush1.bf16.msra.mxu0 0
    %970 = vmatprep.mubr.bf16.mxu0 0
    %971 = vmatmul.mubr.bf16.gmra.mrb[0].mxu0 %v799
    %v972 = vpop.f32.mrb[0].mxu0
    %v973 = vadd.f32 %v884, %v972
    %v974 = vpop.f32.mrb[0].mxu0
    %v975 = vpop.f32.mrb[0].mxu0
    %v976 = vadd.f32 %v887, %v975
    %v977 = vpop.f32.mrb[0].mxu0
    %978 = vdwg.mxu0
    %v979 = vld [vmem:[#allocation13] sm:$0x1]
    %v981 = vlaneseq
    %v982 = vshrl.u32 %v981, 7
    %v983 = vsub.s32 0, %v982
    %v984 = vrot.slane %v979, %v983
    %v986 = vadd.f32 %v973, %v984
    %v987 = vadd.f32 %v976, %v984
    %v988 = vmax.f32 %v986, 0.0
    %v989 = vmax.f32 %v987, 0.0
    %v990 = vpack.c.bf16 %v989, %v988
    %v991 = vld [vmem:[#allocation14] sm:$0xf]
    %v992 = vld [vmem:[#allocation14 + $0x4] sm:$0xf]
    %v993 = vld [vmem:[#allocation14 + $0x8] sm:$0xf]
    %v994 = vld [vmem:[#allocation14 + $0xc] sm:$0xf]
    %v995 = vld [vmem:[#allocation14 + $0x10] sm:$0xf]
    %v996 = vld [vmem:[#allocation14 + $0x14] sm:$0xf]
    %v997 = vld [vmem:[#allocation14 + $0x18] sm:$0xf]
    %v998 = vld [vmem:[#allocation14 + $0x1c] sm:$0xf]
    %v999 = vld [vmem:[#allocation14 + $0x20] sm:$0xf]
    %v1000 = vld [vmem:[#allocation14 + $0x24] sm:$0xf]
    %v1001 = vld [vmem:[#allocation14 + $0x28] sm:$0xf]
    %v1002 = vld [vmem:[#allocation14 + $0x2c] sm:$0xf]
    %v1003 = vld [vmem:[#allocation14 + $0x30] sm:$0xf]
    %v1004 = vld [vmem:[#allocation14 + $0x34] sm:$0xf]
    %v1005 = vld [vmem:[#allocation14 + $0x38] sm:$0xf]
    %v1006 = vld [vmem:[#allocation14 + $0x3c] sm:$0xf]
    %v1007 = vld [vmem:[#allocation16] sm:$0x1]
    %v1009 = vlaneseq
    %v1010 = vshrl.u32 %v1009, 7
    %v1011 = vsub.s32 0, %v1010
    %v1012 = vrot.slane %v1007, %v1011
    %v1030 = vunpack.c.l.b16 %v991
    %v1031 = vunpack.c.l.b16 %v992
    %v1032 = vunpack.c.l.b16 %v993
    %v1033 = vunpack.c.l.b16 %v994
    %v1034 = vunpack.c.l.b16 %v995
    %v1035 = vunpack.c.l.b16 %v996
    %v1036 = vunpack.c.l.b16 %v997
    %v1037 = vunpack.c.l.b16 %v998
    %v1038 = vunpack.c.l.b16 %v999
    %v1039 = vunpack.c.l.b16 %v1000
    %v1040 = vunpack.c.l.b16 %v1001
    %v1041 = vunpack.c.l.b16 %v1002
    %v1042 = vunpack.c.l.b16 %v1003
    %v1043 = vunpack.c.l.b16 %v1004
    %v1044 = vunpack.c.l.b16 %v1005
    %v1045 = vunpack.c.l.b16 %v1006
    %v1046 = vpack.c.b16 %v1031, %v1030
    %v1047 = vpack.c.b16 %v1033, %v1032
    %v1048 = vpack.c.b16 %v1035, %v1034
    %v1049 = vpack.c.b16 %v1037, %v1036
    %v1050 = vpack.c.b16 %v1039, %v1038
    %v1051 = vpack.c.b16 %v1041, %v1040
    %v1052 = vpack.c.b16 %v1043, %v1042
    %v1053 = vpack.c.b16 %v1045, %v1044
    %1062 = vmatprep.subr.bf16.mxu0 0
    %1063 = vmatpush1.bf16.msra.mxu0 %v1046
    %1064 = vmatprep.subr.bf16.mxu0 0
    %1065 = vmatpush1.bf16.msra.mxu0 %v1047
    %1066 = vmatprep.subr.bf16.mxu0 0
    %1067 = vmatpush1.bf16.msra.mxu0 %v1048
    %1068 = vmatprep.subr.bf16.mxu0 0
    %1069 = vmatpush1.bf16.msra.mxu0 %v1049
    %1070 = vmatprep.subr.bf16.mxu0 0
    %1071 = vmatpush1.bf16.msra.mxu0 %v1050
    %1072 = vmatprep.subr.bf16.mxu0 0
    %1073 = vmatpush1.bf16.msra.mxu0 %v1051
    %1074 = vmatprep.subr.bf16.mxu0 0
    %1075 = vmatpush1.bf16.msra.mxu0 %v1052
    %1076 = vmatprep.subr.bf16.mxu0 0
    %1077 = vmatpush1.bf16.msra.mxu0 %v1053
    %1078 = vmatprep.subr.bf16.mxu0 0
    %1079 = vmatpush1.bf16.msra.mxu0 0
    %1080 = vmatprep.subr.bf16.mxu0 0
    %1081 = vmatpush1.bf16.msra.mxu0 0
    %1082 = vmatprep.subr.bf16.mxu0 0
    %1083 = vmatpush1.bf16.msra.mxu0 0
    %1084 = vmatprep.subr.bf16.mxu0 0
    %1085 = vmatpush1.bf16.msra.mxu0 0
    %1086 = vmatprep.subr.bf16.mxu0 0
    %1087 = vmatpush1.bf16.msra.mxu0 0
    %1088 = vmatprep.subr.bf16.mxu0 0
    %1089 = vmatpush1.bf16.msra.mxu0 0
    %1090 = vmatprep.subr.bf16.mxu0 0
    %1091 = vmatpush1.bf16.msra.mxu0 0
    %1092 = vmatprep.subr.bf16.mxu0 0
    %1093 = vmatpush1.bf16.msra.mxu0 0
    %1094 = vmatprep.mubr.bf16.mxu0 0
    %1095 = vmatmul.mubr.bf16.gmra.mrb[0].mxu0 %v990
    %v1096 = vpop.f32.mrb[0].mxu0
    %v1097 = vadd.f32 %v1012, %v1096
    %v1098 = vpop.f32.mrb[0].mxu0
    %v1099 = vpop.f32.mrb[0].mxu0
    %v1100 = vadd.f32 %v1012, %v1099
    %v1101 = vpop.f32.mrb[0].mxu0
    %1102 = vdwg.mxu0
    %v1103 = vpack.c.bf16 %v1100, %v1097
    %v1105 = vunpack.c.l.b16 %v1103
    %v1106 = vunpack.c.h.b16 %v1103
    %v1107 = vpack.c.b16 %v1105, %v1105
    %v1108 = vpack.c.b16 %v1106, %v1106
    %1111 = vst [vmem:[#allocation17] sm:$0xf] %v1107
    %1112 = vst [vmem:[#allocation17 + $0x4] sm:$0xf] %v1108
    // Predicated region
    $region74: #{tpu_custom_call.1} parent=1 // pred_check
      _
    $region75: #{tpu_custom_call.1} parent=1 // pred_check_branch
      %1114 = sbr.rel (0) target = $region77
    $region76: #{tpu_custom_call.1} parent=1 // pred_region
      %s1116 = ssub.s32 128, 128
      %1117 = vsyncadd [#allocation4], %s1116
      %s1118 = sshll.u32 [#allocation17], 4
      %s1119 = int_to_ptr.vmem [resolvable:$true] %s1118
      %1124 = dma.vmem_to_hbm [thread:$0]  %s1119, 128, %s9, [#allocation4], 64, 64, 4
    $region77: #{tpu_custom_call.1} parent=1 // pred_fallthru
      _
    // Predicated region
    $region78: #{tpu_custom_call.1} parent=1 // pred_check
      _
    $region79: #{tpu_custom_call.1} parent=1 // pred_check_branch
      %1126 = sbr.rel (0) target = $region81
    $region80: #{tpu_custom_call.1} parent=1 // pred_region
      %1127 = dma.done [#allocation4], 128
    $region81: #{tpu_custom_call.1} parent=1 // pred_fallthru
      _
    %1128 = vsyncpa [#allocation3], 1
    %1129 = vsyncpa [#allocation6], 1
    %1130 = vsyncpa [#allocation9], 1
    %1131 = vsyncpa [#allocation12], 1
    %1132 = vsyncpa [#allocation15], 1
    %1133 = vsyncpa [#allocation4], 1

</llo_original>
